<compile_context>
chip_gen: v5e
topology: v5e:2x2
jax: 0.10.0
libtpu: 0.0.40
codegen_flags: <defaults>
</compile_context>

<pallas_src>
import jax
import jax.numpy as jnp
from jax import lax
from jax.experimental import pallas as pl
from jax.experimental.pallas import tpu as pltpu


def _round_up(n, m):
    return ((n + m - 1) // m) * m


def gru_context_kernel(x_ref, len_ref, wi_ref, wh_ref, bi_ref, bhn_ref,
                       wlin_ref, blin_ref, out_ref, xw_ref):
    """Full GRU unroll over time + final Linear, single invocation.

    x_ref:    (T*Bp, F)    time-major inputs, flattened (t-major, b-minor)
    len_ref:  (Bp, Hp)     per-sequence lengths, broadcast along lanes (int32)
    wi_ref:   (F, 3*Hp)    fused input weights  [W_ir | W_iz | W_in]
    wh_ref:   (Hp, 3*Hp)   fused hidden weights [W_hr | W_hz | W_hn]
    bi_ref:   (1, 3*Hp)    fused input biases   [b_ir+b_hr | b_iz+b_hz | b_in]
    bhn_ref:  (1, Hp)      b_hn (must stay inside the r*(...) term)
    wlin_ref: (Hp, Op), blin_ref: (1, Op)
    out_ref:  (Bp, Op)
    xw_ref:   (T*Bp, 3*Hp) VMEM scratch: precomputed input projections
    """
    TB, _ = x_ref.shape
    Bp, Hp = len_ref.shape
    T = TB // Bp

    # One-time batched input projection for every timestep (off the serial path).
    xw_ref[...] = (
        jnp.dot(x_ref[...], wi_ref[...], preferred_element_type=jnp.float32)
        + bi_ref[...])

    # Loop-invariant broadcasts hoisted out of the (unrolled) recurrence.
    len_vec = len_ref[...]                                    # (Bp, Hp) int32
    bhn_b = jnp.broadcast_to(bhn_ref[...], (Bp, Hp))          # (Bp, Hp)

    def step(t, h):
        base = pl.multiple_of(t * Bp, Bp)
        xw_t = xw_ref[pl.ds(base, Bp), :]                     # (Bp, 3Hp)
        hw = jnp.dot(h, wh_ref[...],
                     preferred_element_type=jnp.float32)      # (Bp, 3Hp)
        r = jax.nn.sigmoid(xw_t[:, :Hp] + hw[:, :Hp])
        z = jax.nn.sigmoid(xw_t[:, Hp:2 * Hp] + hw[:, Hp:2 * Hp])
        n = jnp.tanh(xw_t[:, 2 * Hp:] + r * (hw[:, 2 * Hp:] + bhn_b))
        h_new = (1.0 - z) * n + z * h
        # pack_sequence emulation: only advance the state while t < length.
        # (NaN padding rows make h_new NaN there; the select discards it.)
        return jnp.where(t < len_vec, h_new, h)

    h0 = jnp.zeros((Bp, Hp), jnp.float32)
    h = lax.fori_loop(0, T, step, h0, unroll=(True if T <= 16 else 8))

    out_ref[...] = (jnp.dot(h, wlin_ref[...],
                            preferred_element_type=jnp.float32)
                    + blin_ref[...])


def gru_context_encoder(x, params):
    """x: (B, T, F) float32 with trailing NaN-padded rows per sequence."""
    B, T, F = x.shape
    H = params["whr"].shape[0]
    O = params["wlin"].shape[1]

    Bp = _round_up(max(B, 8), 8)        # sublane padding
    Hp = _round_up(max(H, 128), 128)    # lane padding for hidden/gates
    Op = _round_up(max(O, 128), 128)    # lane padding for the output

    def pad2(a, rows, cols):
        return jnp.pad(a, ((0, rows - a.shape[0]), (0, cols - a.shape[1])))

    # Fused, zero-padded weights/biases (gate order r|z|n along the lane axis).
    wi = jnp.concatenate([pad2(params["wir"], F, Hp),
                          pad2(params["wiz"], F, Hp),
                          pad2(params["win"], F, Hp)], axis=1)        # (F, 3Hp)
    wh = jnp.concatenate([pad2(params["whr"], Hp, Hp),
                          pad2(params["whz"], Hp, Hp),
                          pad2(params["whn"], Hp, Hp)], axis=1)       # (Hp, 3Hp)
    bi = jnp.concatenate([pad2(params["br"], 1, Hp),
                          pad2(params["bz"], 1, Hp),
                          pad2(params["bin"], 1, Hp)], axis=1)        # (1, 3Hp)
    bhn = pad2(params["bhn"], 1, Hp)                                  # (1, Hp)
    wlin = pad2(params["wlin"], Hp, Op)                               # (Hp, Op)
    blin = pad2(params["blin"], 1, Op)                                # (1, Op)

    # Per-sequence lengths from the trailing-NaN padding.  No nan_to_num and
    # no (T,B,1) mask array: invalid steps are discarded by the kernel select.
    valid = ~jnp.any(jnp.isnan(x), axis=-1)                           # (B, T)
    lengths = jnp.sum(valid, axis=-1).astype(jnp.int32)               # (B,)
    len_tile = jnp.broadcast_to(
        jnp.pad(lengths, (0, Bp - B))[:, None], (Bp, Hp)).astype(jnp.int32)

    # Time-major, batch padded to Bp sublanes, flattened to 2-D (t-major).
    x_tm = jnp.transpose(x, (1, 0, 2))                                # (T, B, F)
    x_tm = jnp.pad(x_tm, ((0, 0), (0, Bp - B), (0, 0)))
    x_2d = x_tm.reshape(T * Bp, F)

    vmem = pl.BlockSpec(memory_space=pltpu.MemorySpace.VMEM)
    args = (x_2d, len_tile, wi, wh, bi, bhn, wlin, blin)

    out = pl.pallas_call(
        gru_context_kernel,
        out_shape=jax.ShapeDtypeStruct((Bp, Op), jnp.float32),
        in_specs=[vmem] * len(args),
        out_specs=vmem,
        scratch_shapes=[pltpu.VMEM((T * Bp, 3 * Hp), jnp.float32)],
    )(*args)

    # PyTorch: self.linear(hn.squeeze()).squeeze()
    return jnp.squeeze(out[:B, :O])


def init_params(key, input_features, hidden_size, out_features):
    """Deterministic init mimicking nn.GRU / nn.Linear uniform(-1/sqrt(H), 1/sqrt(H))."""
    H, F, O = hidden_size, input_features, out_features
    bound = 1.0 / jnp.sqrt(jnp.float32(H))
    keys = jax.random.split(key, 12)

    def u(k, shape):
        return jax.random.uniform(k, shape, jnp.float32, -bound, bound)

    return {
        # GRU input->hidden weights, stored transposed (F, H) per gate (r, z, n)
        "wir": u(keys[0], (F, H)), "wiz": u(keys[1], (F, H)), "win": u(keys[2], (F, H)),
        # GRU hidden->hidden weights, stored transposed (H, H) per gate
        "whr": u(keys[3], (H, H)), "whz": u(keys[4], (H, H)), "whn": u(keys[5], (H, H)),
        # biases: r/z gates combine b_ih + b_hh; n gate keeps them split (PyTorch GRU form)
        "br": u(keys[6], (1, H)), "bz": u(keys[7], (1, H)),
        "bin": u(keys[8], (1, H)), "bhn": u(keys[9], (1, H)),
        # Linear(H -> O)
        "wlin": u(keys[10], (H, O)), "blin": u(keys[11], (1, O)),
    }


def reference_forward(x, params):
    """Pure-JAX reference of the same forward pass (masked GRU + Linear)."""
    valid = ~jnp.any(jnp.isnan(x), axis=-1)
    xc = jnp.nan_to_num(x, nan=0.0)
    B, T, F = x.shape
    H = params["whr"].shape[0]
    h0 = jnp.zeros((B, H), jnp.float32)

    def step(h, inp):
        x_t, m_t = inp
        r = jax.nn.sigmoid(x_t @ params["wir"] + h @ params["whr"] + params["br"])
        z = jax.nn.sigmoid(x_t @ params["wiz"] + h @ params["whz"] + params["bz"])
        n = jnp.tanh(x_t @ params["win"] + params["bin"]
                     + r * (h @ params["whn"] + params["bhn"]))
        h_new = (1.0 - z) * n + z * h
        m = m_t[:, None]
        return m * h_new + (1.0 - m) * h, None

    xs = (jnp.transpose(xc, (1, 0, 2)), jnp.transpose(valid.astype(jnp.float32)))
    h_final, _ = lax.scan(step, h0, xs)
    return jnp.squeeze(h_final @ params["wlin"] + params["blin"])


if __name__ == "__main__":
    # Small shapes consistent with the module: input_features=3 (forced by
    # reshape(-1, 3)), variable sequence lengths via trailing NaN padding.
    B, T, F, H, O = 2, 8, 3, 32, 4

    key = jax.random.PRNGKey(0)
    kx, kp = jax.random.split(key)
    params = init_params(kp, F, H, O)

    x = jax.random.normal(kx, (B, T, F), jnp.float32)
    lengths = jnp.array([T, T - 3], dtype=jnp.int32)           # ragged batch
    t_idx = jnp.arange(T)[None, :, None]
    x = jnp.where(t_idx < lengths[:, None, None], x, jnp.nan)  # NaN padding rows

    out = gru_context_encoder(x, params)
    out = jax.block_until_ready(out)

    ref = reference_forward(x, params)
    assert out.shape == (B, O), out.shape
    assert jnp.allclose(out, ref, atol=2e-5, rtol=2e-5), (out, ref)

    print("KERNEL_OK")
</pallas_src>

<mosaic_0001>
module attributes {stable_mosaic.version = 11 : i64} {
  func.func @gru_context_kernel(%arg0: memref<64x3xf32, #tpu.memory_space<vmem>>, %arg1: memref<8x128xi32, #tpu.memory_space<vmem>>, %arg2: memref<3x384xf32, #tpu.memory_space<vmem>>, %arg3: memref<128x384xf32, #tpu.memory_space<vmem>>, %arg4: memref<1x384xf32, #tpu.memory_space<vmem>>, %arg5: memref<1x128xf32, #tpu.memory_space<vmem>>, %arg6: memref<128x128xf32, #tpu.memory_space<vmem>>, %arg7: memref<1x128xf32, #tpu.memory_space<vmem>>, %arg8: memref<8x128xf32, #tpu.memory_space<vmem>>, %arg9: memref<64x384xf32, #tpu.memory_space<vmem>>) attributes {dimension_semantics = [], scalar_prefetch = 0 : i64, scratch_operands = 1 : i64, tpu.core_type = #tpu.core_type<tc>} {
    %c0 = arith.constant 0 : index
    %c0_0 = arith.constant 0 : index
    %0 = vector.load %arg0[%c0, %c0_0] : memref<64x3xf32, #tpu.memory_space<vmem>>, vector<64x3xf32>
    %c0_1 = arith.constant 0 : index
    %c0_2 = arith.constant 0 : index
    %1 = vector.load %arg2[%c0_1, %c0_2] : memref<3x384xf32, #tpu.memory_space<vmem>>, vector<3x384xf32>
    %cst = arith.constant dense<0.000000e+00> : vector<64x384xf32>
    %2 = tpu.matmul %0, %1, %cst {dimension_numbers = #tpu.dot_dimension_numbers<[1], [0], [0], [1], [0, 0, 1, 1], [], []>} : vector<64x3xf32>, vector<3x384xf32>, vector<64x384xf32> -> vector<64x384xf32>
    %c0_3 = arith.constant 0 : index
    %c0_4 = arith.constant 0 : index
    %3 = vector.load %arg4[%c0_3, %c0_4] : memref<1x384xf32, #tpu.memory_space<vmem>>, vector<1x384xf32>
    %4 = vector.broadcast %3 : vector<1x384xf32> to vector<64x384xf32>
    %5 = arith.addf %2, %4 : vector<64x384xf32>
    %c0_5 = arith.constant 0 : index
    %c0_6 = arith.constant 0 : index
    %6 = vector.load %arg9[%c0_5, %c0_6] : memref<64x384xf32, #tpu.memory_space<vmem>>, vector<64x384xf32>
    tpu.vector_store %arg9[%c0_5, %c0_6], %5 {strides = array<i32>} : memref<64x384xf32, #tpu.memory_space<vmem>>, vector<64x384xf32>,
    %c0_7 = arith.constant 0 : index
    %c0_8 = arith.constant 0 : index
    %7 = vector.load %arg1[%c0_7, %c0_8] : memref<8x128xi32, #tpu.memory_space<vmem>>, vector<8x128xi32>
    %c0_9 = arith.constant 0 : index
    %c0_10 = arith.constant 0 : index
    %8 = vector.load %arg5[%c0_9, %c0_10] : memref<1x128xf32, #tpu.memory_space<vmem>>, vector<1x128xf32>
    %9 = vector.shape_cast %8 : vector<1x128xf32> to vector<1x128xf32>
    %10 = vector.broadcast %9 : vector<1x128xf32> to vector<8x128xf32>
    %cst_11 = arith.constant 0.000000e+00 : f32
    %11 = vector.broadcast %cst_11 : f32 to vector<8x128xf32>
    %c0_i32 = arith.constant 0 : i32
    %c8_i32 = arith.constant 8 : i32
    %12 = arith.muli %c0_i32, %c8_i32 : i32
    %13 = tpu.assume_multiple %12, 8 : i32
    %14 = arith.index_cast %13 : i32 to index
    %c0_12 = arith.constant 0 : index
    %15 = vector.load %arg9[%14, %c0_12] : memref<64x384xf32, #tpu.memory_space<vmem>>, vector<8x384xf32>
    %c0_13 = arith.constant 0 : index
    %c0_14 = arith.constant 0 : index
    %16 = vector.load %arg3[%c0_13, %c0_14] : memref<128x384xf32, #tpu.memory_space<vmem>>, vector<128x384xf32>
    %cst_15 = arith.constant dense<0.000000e+00> : vector<8x384xf32>
    %17 = tpu.matmul %11, %16, %cst_15 {dimension_numbers = #tpu.dot_dimension_numbers<[1], [0], [0], [1], [0, 0, 1, 1], [], []>} : vector<8x128xf32>, vector<128x384xf32>, vector<8x384xf32> -> vector<8x384xf32>
    %18 = vector.extract_strided_slice %15 {offsets = [0, 0], sizes = [8, 128], strides = [1, 1]} : vector<8x384xf32> to vector<8x128xf32>
    %19 = vector.extract_strided_slice %17 {offsets = [0, 0], sizes = [8, 128], strides = [1, 1]} : vector<8x384xf32> to vector<8x128xf32>
    %20 = arith.addf %18, %19 : vector<8x128xf32>
    %21 = arith.negf %20 : vector<8x128xf32>
    %22 = math.exp %21 : vector<8x128xf32>
    %cst_16 = arith.constant 1.000000e+00 : f32
    %23 = vector.broadcast %cst_16 : f32 to vector<8x128xf32>
    %24 = arith.addf %23, %22 : vector<8x128xf32>
    %25 = arith.divf %23, %24 : vector<8x128xf32>
    %26 = vector.extract_strided_slice %15 {offsets = [0, 128], sizes = [8, 128], strides = [1, 1]} : vector<8x384xf32> to vector<8x128xf32>
    %27 = vector.extract_strided_slice %17 {offsets = [0, 128], sizes = [8, 128], strides = [1, 1]} : vector<8x384xf32> to vector<8x128xf32>
    %28 = arith.addf %26, %27 : vector<8x128xf32>
    %29 = arith.negf %28 : vector<8x128xf32>
    %30 = math.exp %29 : vector<8x128xf32>
    %cst_17 = arith.constant 1.000000e+00 : f32
    %31 = vector.broadcast %cst_17 : f32 to vector<8x128xf32>
    %32 = arith.addf %31, %30 : vector<8x128xf32>
    %33 = arith.divf %31, %32 : vector<8x128xf32>
    %34 = vector.extract_strided_slice %15 {offsets = [0, 256], sizes = [8, 128], strides = [1, 1]} : vector<8x384xf32> to vector<8x128xf32>
    %35 = vector.extract_strided_slice %17 {offsets = [0, 256], sizes = [8, 128], strides = [1, 1]} : vector<8x384xf32> to vector<8x128xf32>
    %36 = arith.addf %35, %10 : vector<8x128xf32>
    %37 = arith.mulf %25, %36 : vector<8x128xf32>
    %38 = arith.addf %34, %37 : vector<8x128xf32>
    %39 = math.tanh %38 : vector<8x128xf32>
    %cst_18 = arith.constant 1.000000e+00 : f32
    %40 = vector.broadcast %cst_18 : f32 to vector<8x128xf32>
    %41 = arith.subf %40, %33 : vector<8x128xf32>
    %42 = arith.mulf %41, %39 : vector<8x128xf32>
    %43 = arith.mulf %33, %11 : vector<8x128xf32>
    %44 = arith.addf %42, %43 : vector<8x128xf32>
    %45 = vector.broadcast %c0_i32 : i32 to vector<8x128xi32>
    %46 = arith.cmpi slt, %45, %7 : vector<8x128xi32>
    %47 = arith.select %46, %44, %11 : vector<8x128xi1>, vector<8x128xf32>
    %c1_i32 = arith.constant 1 : i32
    %c8_i32_19 = arith.constant 8 : i32
    %48 = arith.muli %c1_i32, %c8_i32_19 : i32
    %49 = tpu.assume_multiple %48, 8 : i32
    %50 = arith.index_cast %49 : i32 to index
    %c0_20 = arith.constant 0 : index
    %51 = vector.load %arg9[%50, %c0_20] : memref<64x384xf32, #tpu.memory_space<vmem>>, vector<8x384xf32>
    %c0_21 = arith.constant 0 : index
    %c0_22 = arith.constant 0 : index
    %52 = vector.load %arg3[%c0_21, %c0_22] : memref<128x384xf32, #tpu.memory_space<vmem>>, vector<128x384xf32>
    %cst_23 = arith.constant dense<0.000000e+00> : vector<8x384xf32>
    %53 = tpu.matmul %47, %52, %cst_23 {dimension_numbers = #tpu.dot_dimension_numbers<[1], [0], [0], [1], [0, 0, 1, 1], [], []>} : vector<8x128xf32>, vector<128x384xf32>, vector<8x384xf32> -> vector<8x384xf32>
    %54 = vector.extract_strided_slice %51 {offsets = [0, 0], sizes = [8, 128], strides = [1, 1]} : vector<8x384xf32> to vector<8x128xf32>
    %55 = vector.extract_strided_slice %53 {offsets = [0, 0], sizes = [8, 128], strides = [1, 1]} : vector<8x384xf32> to vector<8x128xf32>
    %56 = arith.addf %54, %55 : vector<8x128xf32>
    %57 = arith.negf %56 : vector<8x128xf32>
    %58 = math.exp %57 : vector<8x128xf32>
    %cst_24 = arith.constant 1.000000e+00 : f32
    %59 = vector.broadcast %cst_24 : f32 to vector<8x128xf32>
    %60 = arith.addf %59, %58 : vector<8x128xf32>
    %61 = arith.divf %59, %60 : vector<8x128xf32>
    %62 = vector.extract_strided_slice %51 {offsets = [0, 128], sizes = [8, 128], strides = [1, 1]} : vector<8x384xf32> to vector<8x128xf32>
    %63 = vector.extract_strided_slice %53 {offsets = [0, 128], sizes = [8, 128], strides = [1, 1]} : vector<8x384xf32> to vector<8x128xf32>
    %64 = arith.addf %62, %63 : vector<8x128xf32>
    %65 = arith.negf %64 : vector<8x128xf32>
    %66 = math.exp %65 : vector<8x128xf32>
    %cst_25 = arith.constant 1.000000e+00 : f32
    %67 = vector.broadcast %cst_25 : f32 to vector<8x128xf32>
    %68 = arith.addf %67, %66 : vector<8x128xf32>
    %69 = arith.divf %67, %68 : vector<8x128xf32>
    %70 = vector.extract_strided_slice %51 {offsets = [0, 256], sizes = [8, 128], strides = [1, 1]} : vector<8x384xf32> to vector<8x128xf32>
    %71 = vector.extract_strided_slice %53 {offsets = [0, 256], sizes = [8, 128], strides = [1, 1]} : vector<8x384xf32> to vector<8x128xf32>
    %72 = arith.addf %71, %10 : vector<8x128xf32>
    %73 = arith.mulf %61, %72 : vector<8x128xf32>
    %74 = arith.addf %70, %73 : vector<8x128xf32>
    %75 = math.tanh %74 : vector<8x128xf32>
    %cst_26 = arith.constant 1.000000e+00 : f32
    %76 = vector.broadcast %cst_26 : f32 to vector<8x128xf32>
    %77 = arith.subf %76, %69 : vector<8x128xf32>
    %78 = arith.mulf %77, %75 : vector<8x128xf32>
    %79 = arith.mulf %69, %47 : vector<8x128xf32>
    %80 = arith.addf %78, %79 : vector<8x128xf32>
    %81 = vector.broadcast %c1_i32 : i32 to vector<8x128xi32>
    %82 = arith.cmpi slt, %81, %7 : vector<8x128xi32>
    %83 = arith.select %82, %80, %47 : vector<8x128xi1>, vector<8x128xf32>
    %c2_i32 = arith.constant 2 : i32
    %c8_i32_27 = arith.constant 8 : i32
    %84 = arith.muli %c2_i32, %c8_i32_27 : i32
    %85 = tpu.assume_multiple %84, 8 : i32
    %86 = arith.index_cast %85 : i32 to index
    %c0_28 = arith.constant 0 : index
    %87 = vector.load %arg9[%86, %c0_28] : memref<64x384xf32, #tpu.memory_space<vmem>>, vector<8x384xf32>
    %c0_29 = arith.constant 0 : index
    %c0_30 = arith.constant 0 : index
    %88 = vector.load %arg3[%c0_29, %c0_30] : memref<128x384xf32, #tpu.memory_space<vmem>>, vector<128x384xf32>
    %cst_31 = arith.constant dense<0.000000e+00> : vector<8x384xf32>
    %89 = tpu.matmul %83, %88, %cst_31 {dimension_numbers = #tpu.dot_dimension_numbers<[1], [0], [0], [1], [0, 0, 1, 1], [], []>} : vector<8x128xf32>, vector<128x384xf32>, vector<8x384xf32> -> vector<8x384xf32>
    %90 = vector.extract_strided_slice %87 {offsets = [0, 0], sizes = [8, 128], strides = [1, 1]} : vector<8x384xf32> to vector<8x128xf32>
    %91 = vector.extract_strided_slice %89 {offsets = [0, 0], sizes = [8, 128], strides = [1, 1]} : vector<8x384xf32> to vector<8x128xf32>
    %92 = arith.addf %90, %91 : vector<8x128xf32>
    %93 = arith.negf %92 : vector<8x128xf32>
    %94 = math.exp %93 : vector<8x128xf32>
    %cst_32 = arith.constant 1.000000e+00 : f32
    %95 = vector.broadcast %cst_32 : f32 to vector<8x128xf32>
    %96 = arith.addf %95, %94 : vector<8x128xf32>
    %97 = arith.divf %95, %96 : vector<8x128xf32>
    %98 = vector.extract_strided_slice %87 {offsets = [0, 128], sizes = [8, 128], strides = [1, 1]} : vector<8x384xf32> to vector<8x128xf32>
    %99 = vector.extract_strided_slice %89 {offsets = [0, 128], sizes = [8, 128], strides = [1, 1]} : vector<8x384xf32> to vector<8x128xf32>
    %100 = arith.addf %98, %99 : vector<8x128xf32>
    %101 = arith.negf %100 : vector<8x128xf32>
    %102 = math.exp %101 : vector<8x128xf32>
    %cst_33 = arith.constant 1.000000e+00 : f32
    %103 = vector.broadcast %cst_33 : f32 to vector<8x128xf32>
    %104 = arith.addf %103, %102 : vector<8x128xf32>
    %105 = arith.divf %103, %104 : vector<8x128xf32>
    %106 = vector.extract_strided_slice %87 {offsets = [0, 256], sizes = [8, 128], strides = [1, 1]} : vector<8x384xf32> to vector<8x128xf32>
    %107 = vector.extract_strided_slice %89 {offsets = [0, 256], sizes = [8, 128], strides = [1, 1]} : vector<8x384xf32> to vector<8x128xf32>
    %108 = arith.addf %107, %10 : vector<8x128xf32>
    %109 = arith.mulf %97, %108 : vector<8x128xf32>
    %110 = arith.addf %106, %109 : vector<8x128xf32>
    %111 = math.tanh %110 : vector<8x128xf32>
    %cst_34 = arith.constant 1.000000e+00 : f32
    %112 = vector.broadcast %cst_34 : f32 to vector<8x128xf32>
    %113 = arith.subf %112, %105 : vector<8x128xf32>
    %114 = arith.mulf %113, %111 : vector<8x128xf32>
    %115 = arith.mulf %105, %83 : vector<8x128xf32>
    %116 = arith.addf %114, %115 : vector<8x128xf32>
    %117 = vector.broadcast %c2_i32 : i32 to vector<8x128xi32>
    %118 = arith.cmpi slt, %117, %7 : vector<8x128xi32>
    %119 = arith.select %118, %116, %83 : vector<8x128xi1>, vector<8x128xf32>
    %c3_i32 = arith.constant 3 : i32
    %c8_i32_35 = arith.constant 8 : i32
    %120 = arith.muli %c3_i32, %c8_i32_35 : i32
    %121 = tpu.assume_multiple %120, 8 : i32
    %122 = arith.index_cast %121 : i32 to index
    %c0_36 = arith.constant 0 : index
    %123 = vector.load %arg9[%122, %c0_36] : memref<64x384xf32, #tpu.memory_space<vmem>>, vector<8x384xf32>
    %c0_37 = arith.constant 0 : index
    %c0_38 = arith.constant 0 : index
    %124 = vector.load %arg3[%c0_37, %c0_38] : memref<128x384xf32, #tpu.memory_space<vmem>>, vector<128x384xf32>
    %cst_39 = arith.constant dense<0.000000e+00> : vector<8x384xf32>
    %125 = tpu.matmul %119, %124, %cst_39 {dimension_numbers = #tpu.dot_dimension_numbers<[1], [0], [0], [1], [0, 0, 1, 1], [], []>} : vector<8x128xf32>, vector<128x384xf32>, vector<8x384xf32> -> vector<8x384xf32>
    %126 = vector.extract_strided_slice %123 {offsets = [0, 0], sizes = [8, 128], strides = [1, 1]} : vector<8x384xf32> to vector<8x128xf32>
    %127 = vector.extract_strided_slice %125 {offsets = [0, 0], sizes = [8, 128], strides = [1, 1]} : vector<8x384xf32> to vector<8x128xf32>
    %128 = arith.addf %126, %127 : vector<8x128xf32>
    %129 = arith.negf %128 : vector<8x128xf32>
    %130 = math.exp %129 : vector<8x128xf32>
    %cst_40 = arith.constant 1.000000e+00 : f32
    %131 = vector.broadcast %cst_40 : f32 to vector<8x128xf32>
    %132 = arith.addf %131, %130 : vector<8x128xf32>
    %133 = arith.divf %131, %132 : vector<8x128xf32>
    %134 = vector.extract_strided_slice %123 {offsets = [0, 128], sizes = [8, 128], strides = [1, 1]} : vector<8x384xf32> to vector<8x128xf32>
    %135 = vector.extract_strided_slice %125 {offsets = [0, 128], sizes = [8, 128], strides = [1, 1]} : vector<8x384xf32> to vector<8x128xf32>
    %136 = arith.addf %134, %135 : vector<8x128xf32>
    %137 = arith.negf %136 : vector<8x128xf32>
    %138 = math.exp %137 : vector<8x128xf32>
    %cst_41 = arith.constant 1.000000e+00 : f32
    %139 = vector.broadcast %cst_41 : f32 to vector<8x128xf32>
    %140 = arith.addf %139, %138 : vector<8x128xf32>
    %141 = arith.divf %139, %140 : vector<8x128xf32>
    %142 = vector.extract_strided_slice %123 {offsets = [0, 256], sizes = [8, 128], strides = [1, 1]} : vector<8x384xf32> to vector<8x128xf32>
    %143 = vector.extract_strided_slice %125 {offsets = [0, 256], sizes = [8, 128], strides = [1, 1]} : vector<8x384xf32> to vector<8x128xf32>
    %144 = arith.addf %143, %10 : vector<8x128xf32>
    %145 = arith.mulf %133, %144 : vector<8x128xf32>
    %146 = arith.addf %142, %145 : vector<8x128xf32>
    %147 = math.tanh %146 : vector<8x128xf32>
    %cst_42 = arith.constant 1.000000e+00 : f32
    %148 = vector.broadcast %cst_42 : f32 to vector<8x128xf32>
    %149 = arith.subf %148, %141 : vector<8x128xf32>
    %150 = arith.mulf %149, %147 : vector<8x128xf32>
    %151 = arith.mulf %141, %119 : vector<8x128xf32>
    %152 = arith.addf %150, %151 : vector<8x128xf32>
    %153 = vector.broadcast %c3_i32 : i32 to vector<8x128xi32>
    %154 = arith.cmpi slt, %153, %7 : vector<8x128xi32>
    %155 = arith.select %154, %152, %119 : vector<8x128xi1>, vector<8x128xf32>
    %c4_i32 = arith.constant 4 : i32
    %c8_i32_43 = arith.constant 8 : i32
    %156 = arith.muli %c4_i32, %c8_i32_43 : i32
    %157 = tpu.assume_multiple %156, 8 : i32
    %158 = arith.index_cast %157 : i32 to index
    %c0_44 = arith.constant 0 : index
    %159 = vector.load %arg9[%158, %c0_44] : memref<64x384xf32, #tpu.memory_space<vmem>>, vector<8x384xf32>
    %c0_45 = arith.constant 0 : index
    %c0_46 = arith.constant 0 : index
    %160 = vector.load %arg3[%c0_45, %c0_46] : memref<128x384xf32, #tpu.memory_space<vmem>>, vector<128x384xf32>
    %cst_47 = arith.constant dense<0.000000e+00> : vector<8x384xf32>
    %161 = tpu.matmul %155, %160, %cst_47 {dimension_numbers = #tpu.dot_dimension_numbers<[1], [0], [0], [1], [0, 0, 1, 1], [], []>} : vector<8x128xf32>, vector<128x384xf32>, vector<8x384xf32> -> vector<8x384xf32>
    %162 = vector.extract_strided_slice %159 {offsets = [0, 0], sizes = [8, 128], strides = [1, 1]} : vector<8x384xf32> to vector<8x128xf32>
    %163 = vector.extract_strided_slice %161 {offsets = [0, 0], sizes = [8, 128], strides = [1, 1]} : vector<8x384xf32> to vector<8x128xf32>
    %164 = arith.addf %162, %163 : vector<8x128xf32>
    %165 = arith.negf %164 : vector<8x128xf32>
    %166 = math.exp %165 : vector<8x128xf32>
    %cst_48 = arith.constant 1.000000e+00 : f32
    %167 = vector.broadcast %cst_48 : f32 to vector<8x128xf32>
    %168 = arith.addf %167, %166 : vector<8x128xf32>
    %169 = arith.divf %167, %168 : vector<8x128xf32>
    %170 = vector.extract_strided_slice %159 {offsets = [0, 128], sizes = [8, 128], strides = [1, 1]} : vector<8x384xf32> to vector<8x128xf32>
    %171 = vector.extract_strided_slice %161 {offsets = [0, 128], sizes = [8, 128], strides = [1, 1]} : vector<8x384xf32> to vector<8x128xf32>
    %172 = arith.addf %170, %171 : vector<8x128xf32>
    %173 = arith.negf %172 : vector<8x128xf32>
    %174 = math.exp %173 : vector<8x128xf32>
    %cst_49 = arith.constant 1.000000e+00 : f32
    %175 = vector.broadcast %cst_49 : f32 to vector<8x128xf32>
    %176 = arith.addf %175, %174 : vector<8x128xf32>
    %177 = arith.divf %175, %176 : vector<8x128xf32>
    %178 = vector.extract_strided_slice %159 {offsets = [0, 256], sizes = [8, 128], strides = [1, 1]} : vector<8x384xf32> to vector<8x128xf32>
    %179 = vector.extract_strided_slice %161 {offsets = [0, 256], sizes = [8, 128], strides = [1, 1]} : vector<8x384xf32> to vector<8x128xf32>
    %180 = arith.addf %179, %10 : vector<8x128xf32>
    %181 = arith.mulf %169, %180 : vector<8x128xf32>
    %182 = arith.addf %178, %181 : vector<8x128xf32>
    %183 = math.tanh %182 : vector<8x128xf32>
    %cst_50 = arith.constant 1.000000e+00 : f32
    %184 = vector.broadcast %cst_50 : f32 to vector<8x128xf32>
    %185 = arith.subf %184, %177 : vector<8x128xf32>
    %186 = arith.mulf %185, %183 : vector<8x128xf32>
    %187 = arith.mulf %177, %155 : vector<8x128xf32>
    %188 = arith.addf %186, %187 : vector<8x128xf32>
    %189 = vector.broadcast %c4_i32 : i32 to vector<8x128xi32>
    %190 = arith.cmpi slt, %189, %7 : vector<8x128xi32>
    %191 = arith.select %190, %188, %155 : vector<8x128xi1>, vector<8x128xf32>
    %c5_i32 = arith.constant 5 : i32
    %c8_i32_51 = arith.constant 8 : i32
    %192 = arith.muli %c5_i32, %c8_i32_51 : i32
    %193 = tpu.assume_multiple %192, 8 : i32
    %194 = arith.index_cast %193 : i32 to index
    %c0_52 = arith.constant 0 : index
    %195 = vector.load %arg9[%194, %c0_52] : memref<64x384xf32, #tpu.memory_space<vmem>>, vector<8x384xf32>
    %c0_53 = arith.constant 0 : index
    %c0_54 = arith.constant 0 : index
    %196 = vector.load %arg3[%c0_53, %c0_54] : memref<128x384xf32, #tpu.memory_space<vmem>>, vector<128x384xf32>
    %cst_55 = arith.constant dense<0.000000e+00> : vector<8x384xf32>
    %197 = tpu.matmul %191, %196, %cst_55 {dimension_numbers = #tpu.dot_dimension_numbers<[1], [0], [0], [1], [0, 0, 1, 1], [], []>} : vector<8x128xf32>, vector<128x384xf32>, vector<8x384xf32> -> vector<8x384xf32>
    %198 = vector.extract_strided_slice %195 {offsets = [0, 0], sizes = [8, 128], strides = [1, 1]} : vector<8x384xf32> to vector<8x128xf32>
    %199 = vector.extract_strided_slice %197 {offsets = [0, 0], sizes = [8, 128], strides = [1, 1]} : vector<8x384xf32> to vector<8x128xf32>
    %200 = arith.addf %198, %199 : vector<8x128xf32>
    %201 = arith.negf %200 : vector<8x128xf32>
    %202 = math.exp %201 : vector<8x128xf32>
    %cst_56 = arith.constant 1.000000e+00 : f32
    %203 = vector.broadcast %cst_56 : f32 to vector<8x128xf32>
    %204 = arith.addf %203, %202 : vector<8x128xf32>
    %205 = arith.divf %203, %204 : vector<8x128xf32>
    %206 = vector.extract_strided_slice %195 {offsets = [0, 128], sizes = [8, 128], strides = [1, 1]} : vector<8x384xf32> to vector<8x128xf32>
    %207 = vector.extract_strided_slice %197 {offsets = [0, 128], sizes = [8, 128], strides = [1, 1]} : vector<8x384xf32> to vector<8x128xf32>
    %208 = arith.addf %206, %207 : vector<8x128xf32>
    %209 = arith.negf %208 : vector<8x128xf32>
    %210 = math.exp %209 : vector<8x128xf32>
    %cst_57 = arith.constant 1.000000e+00 : f32
    %211 = vector.broadcast %cst_57 : f32 to vector<8x128xf32>
    %212 = arith.addf %211, %210 : vector<8x128xf32>
    %213 = arith.divf %211, %212 : vector<8x128xf32>
    %214 = vector.extract_strided_slice %195 {offsets = [0, 256], sizes = [8, 128], strides = [1, 1]} : vector<8x384xf32> to vector<8x128xf32>
    %215 = vector.extract_strided_slice %197 {offsets = [0, 256], sizes = [8, 128], strides = [1, 1]} : vector<8x384xf32> to vector<8x128xf32>
    %216 = arith.addf %215, %10 : vector<8x128xf32>
    %217 = arith.mulf %205, %216 : vector<8x128xf32>
    %218 = arith.addf %214, %217 : vector<8x128xf32>
    %219 = math.tanh %218 : vector<8x128xf32>
    %cst_58 = arith.constant 1.000000e+00 : f32
    %220 = vector.broadcast %cst_58 : f32 to vector<8x128xf32>
    %221 = arith.subf %220, %213 : vector<8x128xf32>
    %222 = arith.mulf %221, %219 : vector<8x128xf32>
    %223 = arith.mulf %213, %191 : vector<8x128xf32>
    %224 = arith.addf %222, %223 : vector<8x128xf32>
    %225 = vector.broadcast %c5_i32 : i32 to vector<8x128xi32>
    %226 = arith.cmpi slt, %225, %7 : vector<8x128xi32>
    %227 = arith.select %226, %224, %191 : vector<8x128xi1>, vector<8x128xf32>
    %c6_i32 = arith.constant 6 : i32
    %c8_i32_59 = arith.constant 8 : i32
    %228 = arith.muli %c6_i32, %c8_i32_59 : i32
    %229 = tpu.assume_multiple %228, 8 : i32
    %230 = arith.index_cast %229 : i32 to index
    %c0_60 = arith.constant 0 : index
    %231 = vector.load %arg9[%230, %c0_60] : memref<64x384xf32, #tpu.memory_space<vmem>>, vector<8x384xf32>
    %c0_61 = arith.constant 0 : index
    %c0_62 = arith.constant 0 : index
    %232 = vector.load %arg3[%c0_61, %c0_62] : memref<128x384xf32, #tpu.memory_space<vmem>>, vector<128x384xf32>
    %cst_63 = arith.constant dense<0.000000e+00> : vector<8x384xf32>
    %233 = tpu.matmul %227, %232, %cst_63 {dimension_numbers = #tpu.dot_dimension_numbers<[1], [0], [0], [1], [0, 0, 1, 1], [], []>} : vector<8x128xf32>, vector<128x384xf32>, vector<8x384xf32> -> vector<8x384xf32>
    %234 = vector.extract_strided_slice %231 {offsets = [0, 0], sizes = [8, 128], strides = [1, 1]} : vector<8x384xf32> to vector<8x128xf32>
    %235 = vector.extract_strided_slice %233 {offsets = [0, 0], sizes = [8, 128], strides = [1, 1]} : vector<8x384xf32> to vector<8x128xf32>
    %236 = arith.addf %234, %235 : vector<8x128xf32>
    %237 = arith.negf %236 : vector<8x128xf32>
    %238 = math.exp %237 : vector<8x128xf32>
    %cst_64 = arith.constant 1.000000e+00 : f32
    %239 = vector.broadcast %cst_64 : f32 to vector<8x128xf32>
    %240 = arith.addf %239, %238 : vector<8x128xf32>
    %241 = arith.divf %239, %240 : vector<8x128xf32>
    %242 = vector.extract_strided_slice %231 {offsets = [0, 128], sizes = [8, 128], strides = [1, 1]} : vector<8x384xf32> to vector<8x128xf32>
    %243 = vector.extract_strided_slice %233 {offsets = [0, 128], sizes = [8, 128], strides = [1, 1]} : vector<8x384xf32> to vector<8x128xf32>
    %244 = arith.addf %242, %243 : vector<8x128xf32>
    %245 = arith.negf %244 : vector<8x128xf32>
    %246 = math.exp %245 : vector<8x128xf32>
    %cst_65 = arith.constant 1.000000e+00 : f32
    %247 = vector.broadcast %cst_65 : f32 to vector<8x128xf32>
    %248 = arith.addf %247, %246 : vector<8x128xf32>
    %249 = arith.divf %247, %248 : vector<8x128xf32>
    %250 = vector.extract_strided_slice %231 {offsets = [0, 256], sizes = [8, 128], strides = [1, 1]} : vector<8x384xf32> to vector<8x128xf32>
    %251 = vector.extract_strided_slice %233 {offsets = [0, 256], sizes = [8, 128], strides = [1, 1]} : vector<8x384xf32> to vector<8x128xf32>
    %252 = arith.addf %251, %10 : vector<8x128xf32>
    %253 = arith.mulf %241, %252 : vector<8x128xf32>
    %254 = arith.addf %250, %253 : vector<8x128xf32>
    %255 = math.tanh %254 : vector<8x128xf32>
    %cst_66 = arith.constant 1.000000e+00 : f32
    %256 = vector.broadcast %cst_66 : f32 to vector<8x128xf32>
    %257 = arith.subf %256, %249 : vector<8x128xf32>
    %258 = arith.mulf %257, %255 : vector<8x128xf32>
    %259 = arith.mulf %249, %227 : vector<8x128xf32>
    %260 = arith.addf %258, %259 : vector<8x128xf32>
    %261 = vector.broadcast %c6_i32 : i32 to vector<8x128xi32>
    %262 = arith.cmpi slt, %261, %7 : vector<8x128xi32>
    %263 = arith.select %262, %260, %227 : vector<8x128xi1>, vector<8x128xf32>
    %c7_i32 = arith.constant 7 : i32
    %c8_i32_67 = arith.constant 8 : i32
    %264 = arith.muli %c7_i32, %c8_i32_67 : i32
    %265 = tpu.assume_multiple %264, 8 : i32
    %266 = arith.index_cast %265 : i32 to index
    %c0_68 = arith.constant 0 : index
    %267 = vector.load %arg9[%266, %c0_68] : memref<64x384xf32, #tpu.memory_space<vmem>>, vector<8x384xf32>
    %c0_69 = arith.constant 0 : index
    %c0_70 = arith.constant 0 : index
    %268 = vector.load %arg3[%c0_69, %c0_70] : memref<128x384xf32, #tpu.memory_space<vmem>>, vector<128x384xf32>
    %cst_71 = arith.constant dense<0.000000e+00> : vector<8x384xf32>
    %269 = tpu.matmul %263, %268, %cst_71 {dimension_numbers = #tpu.dot_dimension_numbers<[1], [0], [0], [1], [0, 0, 1, 1], [], []>} : vector<8x128xf32>, vector<128x384xf32>, vector<8x384xf32> -> vector<8x384xf32>
    %270 = vector.extract_strided_slice %267 {offsets = [0, 0], sizes = [8, 128], strides = [1, 1]} : vector<8x384xf32> to vector<8x128xf32>
    %271 = vector.extract_strided_slice %269 {offsets = [0, 0], sizes = [8, 128], strides = [1, 1]} : vector<8x384xf32> to vector<8x128xf32>
    %272 = arith.addf %270, %271 : vector<8x128xf32>
    %273 = arith.negf %272 : vector<8x128xf32>
    %274 = math.exp %273 : vector<8x128xf32>
    %cst_72 = arith.constant 1.000000e+00 : f32
    %275 = vector.broadcast %cst_72 : f32 to vector<8x128xf32>
    %276 = arith.addf %275, %274 : vector<8x128xf32>
    %277 = arith.divf %275, %276 : vector<8x128xf32>
    %278 = vector.extract_strided_slice %267 {offsets = [0, 128], sizes = [8, 128], strides = [1, 1]} : vector<8x384xf32> to vector<8x128xf32>
    %279 = vector.extract_strided_slice %269 {offsets = [0, 128], sizes = [8, 128], strides = [1, 1]} : vector<8x384xf32> to vector<8x128xf32>
    %280 = arith.addf %278, %279 : vector<8x128xf32>
    %281 = arith.negf %280 : vector<8x128xf32>
    %282 = math.exp %281 : vector<8x128xf32>
    %cst_73 = arith.constant 1.000000e+00 : f32
    %283 = vector.broadcast %cst_73 : f32 to vector<8x128xf32>
    %284 = arith.addf %283, %282 : vector<8x128xf32>
    %285 = arith.divf %283, %284 : vector<8x128xf32>
    %286 = vector.extract_strided_slice %267 {offsets = [0, 256], sizes = [8, 128], strides = [1, 1]} : vector<8x384xf32> to vector<8x128xf32>
    %287 = vector.extract_strided_slice %269 {offsets = [0, 256], sizes = [8, 128], strides = [1, 1]} : vector<8x384xf32> to vector<8x128xf32>
    %288 = arith.addf %287, %10 : vector<8x128xf32>
    %289 = arith.mulf %277, %288 : vector<8x128xf32>
    %290 = arith.addf %286, %289 : vector<8x128xf32>
    %291 = math.tanh %290 : vector<8x128xf32>
    %cst_74 = arith.constant 1.000000e+00 : f32
    %292 = vector.broadcast %cst_74 : f32 to vector<8x128xf32>
    %293 = arith.subf %292, %285 : vector<8x128xf32>
    %294 = arith.mulf %293, %291 : vector<8x128xf32>
    %295 = arith.mulf %285, %263 : vector<8x128xf32>
    %296 = arith.addf %294, %295 : vector<8x128xf32>
    %297 = vector.broadcast %c7_i32 : i32 to vector<8x128xi32>
    %298 = arith.cmpi slt, %297, %7 : vector<8x128xi32>
    %299 = arith.select %298, %296, %263 : vector<8x128xi1>, vector<8x128xf32>
    %c8_i32_75 = arith.constant 8 : i32
    %c0_76 = arith.constant 0 : index
    %c0_77 = arith.constant 0 : index
    %300 = vector.load %arg6[%c0_76, %c0_77] : memref<128x128xf32, #tpu.memory_space<vmem>>, vector<128x128xf32>
    %cst_78 = arith.constant dense<0.000000e+00> : vector<8x128xf32>
    %301 = tpu.matmul %299, %300, %cst_78 {dimension_numbers = #tpu.dot_dimension_numbers<[1], [0], [0], [1], [0, 0, 1, 1], [], []>} : vector<8x128xf32>, vector<128x128xf32>, vector<8x128xf32> -> vector<8x128xf32>
    %c0_79 = arith.constant 0 : index
    %c0_80 = arith.constant 0 : index
    %302 = vector.load %arg7[%c0_79, %c0_80] : memref<1x128xf32, #tpu.memory_space<vmem>>, vector<1x128xf32>
    %303 = vector.broadcast %302 : vector<1x128xf32> to vector<8x128xf32>
    %304 = arith.addf %301, %303 : vector<8x128xf32>
    %c0_81 = arith.constant 0 : index
    %c0_82 = arith.constant 0 : index
    %305 = vector.load %arg8[%c0_81, %c0_82] : memref<8x128xf32, #tpu.memory_space<vmem>>, vector<8x128xf32>
    tpu.vector_store %arg8[%c0_81, %c0_82], %304 {strides = array<i32>} : memref<8x128xf32, #tpu.memory_space<vmem>>, vector<8x128xf32>,
    return
  }
}

</mosaic_0001>

<llo_original>
// kernel: tpu_custom_call.1
$region0: #{tpu_custom_call.1}
  #allocation0 [shape = 'u32[]', space=smem, size = 0x4, offset = 0x4, fixed_abs, tag = 'smem constant byte address 0x4 - core index']
  #allocation1 [shape = 'u32[72,128]{1,0:T(1,128)}', space=vmem, size = 0x9000, scoped, tag = 'internal scratch']
  #allocation2 [shape = 'f32[64,384]{1,0:T(8,128)}', space=vmem, size = 0x18000, scoped, tag = 'scratch operand']
  %s0 = inlined_call_operand.vmem [shape: f32[64,3], index: 0, kind: input, shape index: {}]
  %s1 = inlined_call_operand.vmem [shape: s32[8,128], index: 1, kind: input, shape index: {}]
  %s2 = inlined_call_operand.vmem [shape: f32[3,384], index: 2, kind: input, shape index: {}]
  %s3 = inlined_call_operand.hbm [shape: f32[128,384], index: 3, kind: input, shape index: {}]
  %s4 = inlined_call_operand.vmem [shape: f32[1,384], index: 4, kind: input, shape index: {}]
  %s5 = inlined_call_operand.vmem [shape: f32[1,128], index: 5, kind: input, shape index: {}]
  %s6 = inlined_call_operand.hbm [shape: f32[128,128], index: 6, kind: input, shape index: {}]
  %s7 = inlined_call_operand.vmem [shape: f32[1,128], index: 7, kind: input, shape index: {}]
  %s8 = inlined_call_operand.hbm [shape: f32[8,128], index: 8, kind: output, shape index: {}]
  %s9 = sld [smem:[#allocation0]]
  $region50: #{tpu_custom_call.1} parent=0
    _
  %s11 = ssub.s32 1, %s9
  %s12 = scalar_select 0, %s11, %s9
  $region1: #{tpu_custom_call.1} parent=0
    #allocation3 [shape = 'u8[196608]{0}', space=vmem, size = 0x30000, scoped, tag = 'input window, operand 3, single buffered']
    #allocation4 [shape = 's32[1]{0}', space=sflag, size = 0x4, scoped, tag = 'scoped memory for tpu_custom_call.1']
    #allocation5 [shape = 's32[1]{0}', space=sflag, size = 0x4, scoped, tag = 'scoped memory for tpu_custom_call.1']
    #allocation6 [shape = 'u8[65536]{0}', space=vmem, size = 0x10000, scoped, tag = 'input window, operand 6, single buffered']
    #allocation7 [shape = 's32[1]{0}', space=sflag, size = 0x4, scoped, tag = 'scoped memory for tpu_custom_call.1']
    #allocation8 [shape = 'u8[4096]{0}', space=vmem, size = 0x1000, scoped, tag = 'output window, operand 0, single buffered']
    %13 = vsyncpa [#allocation4], 0
    %14 = vsyncpa [#allocation7], 0
    %15 = vsyncpa [#allocation5], 0
    // Predicated region
    $region2: #{tpu_custom_call.1} parent=1 // pred_check
      _
    $region3: #{tpu_custom_call.1} parent=1 // pred_check_branch
      %17 = sbr.rel (0) target = $region5
    $region4: #{tpu_custom_call.1} parent=1 // pred_region
      _
    $region5: #{tpu_custom_call.1} parent=1 // pred_fallthru
      _
    // Predicated region
    $region6: #{tpu_custom_call.1} parent=1 // pred_check
      _
    $region7: #{tpu_custom_call.1} parent=1 // pred_check_branch
      %19 = sbr.rel (0) target = $region9
    $region8: #{tpu_custom_call.1} parent=1 // pred_region
      _
    $region9: #{tpu_custom_call.1} parent=1 // pred_fallthru
      _
    // Predicated region
    $region10: #{tpu_custom_call.1} parent=1 // pred_check
      _
    $region11: #{tpu_custom_call.1} parent=1 // pred_check_branch
      %21 = sbr.rel (0) target = $region13
    $region12: #{tpu_custom_call.1} parent=1 // pred_region
      _
    $region13: #{tpu_custom_call.1} parent=1 // pred_fallthru
      _
    // Predicated region
    $region14: #{tpu_custom_call.1} parent=1 // pred_check
      _
    $region15: #{tpu_custom_call.1} parent=1 // pred_check_branch
      %23 = sbr.rel (0) target = $region17
    $region16: #{tpu_custom_call.1} parent=1 // pred_region
      %25 = vsyncadd [#allocation4], 0
      %s26 = sshll.u32 %s3, 4
      %s27 = int_to_ptr.hbm [resolvable:$true] %s26
      %s28 = sshll.u32 [#allocation3], 4
      %s29 = int_to_ptr.vmem [resolvable:$true] %s28
      %34 = dma.hbm_to_vmem [thread:$0]  %s27, 6144, %s29, [#allocation4], 384, 384, 24
    $region17: #{tpu_custom_call.1} parent=1 // pred_fallthru
      _
    // Predicated region
    $region18: #{tpu_custom_call.1} parent=1 // pred_check
      _
    $region19: #{tpu_custom_call.1} parent=1 // pred_check_branch
      %36 = sbr.rel (0) target = $region21
    $region20: #{tpu_custom_call.1} parent=1 // pred_region
      _
    $region21: #{tpu_custom_call.1} parent=1 // pred_fallthru
      _
    // Predicated region
    $region22: #{tpu_custom_call.1} parent=1 // pred_check
      _
    $region23: #{tpu_custom_call.1} parent=1 // pred_check_branch
      %38 = sbr.rel (0) target = $region25
    $region24: #{tpu_custom_call.1} parent=1 // pred_region
      _
    $region25: #{tpu_custom_call.1} parent=1 // pred_fallthru
      _
    // Predicated region
    $region26: #{tpu_custom_call.1} parent=1 // pred_check
      _
    $region27: #{tpu_custom_call.1} parent=1 // pred_check_branch
      %40 = sbr.rel (0) target = $region29
    $region28: #{tpu_custom_call.1} parent=1 // pred_region
      %42 = vsyncadd [#allocation7], 0
      %s43 = sshll.u32 %s6, 4
      %s44 = int_to_ptr.hbm [resolvable:$true] %s43
      %s45 = sshll.u32 [#allocation6], 4
      %s46 = int_to_ptr.vmem [resolvable:$true] %s45
      %51 = dma.hbm_to_vmem [thread:$0]  %s44, 2048, %s46, [#allocation7], 128, 128, 8
    $region29: #{tpu_custom_call.1} parent=1 // pred_fallthru
      _
    // Predicated region
    $region30: #{tpu_custom_call.1} parent=1 // pred_check
      _
    $region31: #{tpu_custom_call.1} parent=1 // pred_check_branch
      %53 = sbr.rel (0) target = $region33
    $region32: #{tpu_custom_call.1} parent=1 // pred_region
      _
    $region33: #{tpu_custom_call.1} parent=1 // pred_fallthru
      _
    // Predicated region
    $region34: #{tpu_custom_call.1} parent=1 // pred_check
      _
    $region35: #{tpu_custom_call.1} parent=1 // pred_check_branch
      %55 = sbr.rel (0) target = $region37
    $region36: #{tpu_custom_call.1} parent=1 // pred_region
      %57 = dma.done [#allocation4], 6144
    $region37: #{tpu_custom_call.1} parent=1 // pred_fallthru
      _
    // Predicated region
    $region38: #{tpu_custom_call.1} parent=1 // pred_check
      _
    $region39: #{tpu_custom_call.1} parent=1 // pred_check_branch
      %59 = sbr.rel (0) target = $region41
    $region40: #{tpu_custom_call.1} parent=1 // pred_region
      %61 = dma.done [#allocation7], 2048
    $region41: #{tpu_custom_call.1} parent=1 // pred_fallthru
      _
    %v62 = vld [vmem:[%s0] sm:$0xff]
    %v63 = vld [vmem:[%s0 + $0x8] sm:$0xff]
    %v64 = vld [vmem:[%s0 + $0x10] sm:$0xff]
    %v65 = vld [vmem:[%s0 + $0x18] sm:$0xff]
    %v66 = vld [vmem:[%s0 + $0x20] sm:$0xff]
    %v67 = vld [vmem:[%s0 + $0x28] sm:$0xff]
    %v68 = vld [vmem:[%s0 + $0x30] sm:$0xff]
    %v69 = vld [vmem:[%s0 + $0x38] sm:$0xff]
    %v70 = vld [vmem:[%s2] sm:$0x77]
    %v71 = vld [vmem:[%s2 + $0x8] sm:$0x7]
    %v72 = vld [vmem:[%s4] sm:$0x7]
    %v74 = vperm.slane %v72, 0
    %v75 = vperm.slane %v72, 1
    %v76 = vperm.slane %v72, 2
    %82 = vst [vmem:[#allocation1] ss:$2 sm:$0xff] %v70
    %s83 = scalar_lea.vmem [#allocation1], 16
    %84 = vst [vmem:[%s83] ss:$2 sm:$0xff] %v71
    %v85 = vld.sshfl [vmem:[#allocation1] sm:$0xff pattern:$0x75316420]
    %v86 = vld.sshfl [vmem:[#allocation1 + $0x8] sm:$0xff pattern:$0x75316420]
    %v87 = vld.sshfl [vmem:[#allocation1 + $0x10] sm:$0xff pattern:$0x75316420]
    %vm88 = vcmask 23552
    %v90 = vsel %vm88, %v62, 0
    %v93 = vsel %vm88, %v63, 0
    %v96 = vsel %vm88, %v64, 0
    %v99 = vsel %vm88, %v65, 0
    %v102 = vsel %vm88, %v66, 0
    %v105 = vsel %vm88, %v67, 0
    %v108 = vsel %vm88, %v68, 0
    %v111 = vsel %vm88, %v69, 0
    %vm113 = vcmask 1042432
    %v114 = vsel %vm113, %v85, 0
    %v116 = vsel %vm113, %v86, 0
    %v118 = vsel %vm113, %v87, 0
    %120 = vmatpush.msra.mxu0 0.0
    %121 = vmatpush.msra.mxu0 0.0
    %122 = vmatpush.msra.mxu0 0.0
    %123 = vmatpush.msra.mxu0 0.0
    %124 = vmatpush.msra.mxu0 0.0
    %125 = vmatpush.msra.mxu0 0.0
    %126 = vmatpush.msra.mxu0 0.0
    %127 = vmatpush.msra.mxu0 0.0
    %128 = vmatpush.msra.mxu0 0.0
    %129 = vmatpush.msra.mxu0 0.0
    %130 = vmatpush.msra.mxu0 0.0
    %131 = vmatpush.msra.mxu0 0.0
    %132 = vmatpush.msra.mxu0 0.0
    %133 = vmatpush.msra.mxu0 0.0
    %134 = vmatpush.msra.mxu0 0.0
    %135 = vmatpush.msra.mxu0 %v114
    %136 = vmatmul.f32.gmra.mxu0 %v90
    %v137 = vpop.f32.mrf.mxu0
    %v138 = vadd.f32 %v74, %v137
    %139 = vmatmul.f32.gmra.mxu0 %v93
    %v140 = vpop.f32.mrf.mxu0
    %v141 = vadd.f32 %v74, %v140
    %142 = vmatmul.f32.gmra.mxu0 %v96
    %v143 = vpop.f32.mrf.mxu0
    %v144 = vadd.f32 %v74, %v143
    %145 = vmatmul.f32.gmra.mxu0 %v99
    %v146 = vpop.f32.mrf.mxu0
    %v147 = vadd.f32 %v74, %v146
    %148 = vmatmul.f32.gmra.mxu0 %v102
    %v149 = vpop.f32.mrf.mxu0
    %v150 = vadd.f32 %v74, %v149
    %151 = vmatmul.f32.gmra.mxu0 %v105
    %v152 = vpop.f32.mrf.mxu0
    %v153 = vadd.f32 %v74, %v152
    %154 = vmatmul.f32.gmra.mxu0 %v108
    %v155 = vpop.f32.mrf.mxu0
    %v156 = vadd.f32 %v74, %v155
    %157 = vmatmul.f32.gmra.mxu0 %v111
    %v158 = vpop.f32.mrf.mxu0
    %v159 = vadd.f32 %v74, %v158
    %160 = vdwg.mxu0
    %161 = vmatpush.msra.mxu0 0.0
    %162 = vmatpush.msra.mxu0 0.0
    %163 = vmatpush.msra.mxu0 0.0
    %164 = vmatpush.msra.mxu0 0.0
    %165 = vmatpush.msra.mxu0 0.0
    %166 = vmatpush.msra.mxu0 0.0
    %167 = vmatpush.msra.mxu0 0.0
    %168 = vmatpush.msra.mxu0 0.0
    %169 = vmatpush.msra.mxu0 0.0
    %170 = vmatpush.msra.mxu0 0.0
    %171 = vmatpush.msra.mxu0 0.0
    %172 = vmatpush.msra.mxu0 0.0
    %173 = vmatpush.msra.mxu0 0.0
    %174 = vmatpush.msra.mxu0 0.0
    %175 = vmatpush.msra.mxu0 0.0
    %176 = vmatpush.msra.mxu0 %v116
    %177 = vmatmul.f32.gmra.mxu0 %v90
    %v178 = vpop.f32.mrf.mxu0
    %v179 = vadd.f32 %v75, %v178
    %180 = vmatmul.f32.gmra.mxu0 %v93
    %v181 = vpop.f32.mrf.mxu0
    %v182 = vadd.f32 %v75, %v181
    %183 = vmatmul.f32.gmra.mxu0 %v96
    %v184 = vpop.f32.mrf.mxu0
    %v185 = vadd.f32 %v75, %v184
    %186 = vmatmul.f32.gmra.mxu0 %v99
    %v187 = vpop.f32.mrf.mxu0
    %v188 = vadd.f32 %v75, %v187
    %189 = vmatmul.f32.gmra.mxu0 %v102
    %v190 = vpop.f32.mrf.mxu0
    %v191 = vadd.f32 %v75, %v190
    %192 = vmatmul.f32.gmra.mxu0 %v105
    %v193 = vpop.f32.mrf.mxu0
    %v194 = vadd.f32 %v75, %v193
    %195 = vmatmul.f32.gmra.mxu0 %v108
    %v196 = vpop.f32.mrf.mxu0
    %v197 = vadd.f32 %v75, %v196
    %198 = vmatmul.f32.gmra.mxu0 %v111
    %v199 = vpop.f32.mrf.mxu0
    %v200 = vadd.f32 %v75, %v199
    %201 = vdwg.mxu0
    %202 = vmatpush.msra.mxu0 0.0
    %203 = vmatpush.msra.mxu0 0.0
    %204 = vmatpush.msra.mxu0 0.0
    %205 = vmatpush.msra.mxu0 0.0
    %206 = vmatpush.msra.mxu0 0.0
    %207 = vmatpush.msra.mxu0 0.0
    %208 = vmatpush.msra.mxu0 0.0
    %209 = vmatpush.msra.mxu0 0.0
    %210 = vmatpush.msra.mxu0 0.0
    %211 = vmatpush.msra.mxu0 0.0
    %212 = vmatpush.msra.mxu0 0.0
    %213 = vmatpush.msra.mxu0 0.0
    %214 = vmatpush.msra.mxu0 0.0
    %215 = vmatpush.msra.mxu0 0.0
    %216 = vmatpush.msra.mxu0 0.0
    %217 = vmatpush.msra.mxu0 %v118
    %218 = vmatmul.f32.gmra.mxu0 %v90
    %v219 = vpop.f32.mrf.mxu0
    %v220 = vadd.f32 %v76, %v219
    %221 = vmatmul.f32.gmra.mxu0 %v93
    %v222 = vpop.f32.mrf.mxu0
    %v223 = vadd.f32 %v76, %v222
    %224 = vmatmul.f32.gmra.mxu0 %v96
    %v225 = vpop.f32.mrf.mxu0
    %v226 = vadd.f32 %v76, %v225
    %227 = vmatmul.f32.gmra.mxu0 %v99
    %v228 = vpop.f32.mrf.mxu0
    %v229 = vadd.f32 %v76, %v228
    %230 = vmatmul.f32.gmra.mxu0 %v102
    %v231 = vpop.f32.mrf.mxu0
    %v232 = vadd.f32 %v76, %v231
    %233 = vmatmul.f32.gmra.mxu0 %v105
    %v234 = vpop.f32.mrf.mxu0
    %v235 = vadd.f32 %v76, %v234
    %236 = vmatmul.f32.gmra.mxu0 %v108
    %v237 = vpop.f32.mrf.mxu0
    %v238 = vadd.f32 %v76, %v237
    %239 = vmatmul.f32.gmra.mxu0 %v111
    %v240 = vpop.f32.mrf.mxu0
    %v241 = vadd.f32 %v76, %v240
    %242 = vdwg.mxu0
    %243 = vst [vmem:[#allocation2] sm:$0xff] %v138
    %244 = vst [vmem:[#allocation2 + $0x8] sm:$0xff] %v179
    %245 = vst [vmem:[#allocation2 + $0x10] sm:$0xff] %v220
    %246 = vst [vmem:[#allocation2 + $0x18] sm:$0xff] %v141
    %247 = vst [vmem:[#allocation2 + $0x20] sm:$0xff] %v182
    %248 = vst [vmem:[#allocation2 + $0x28] sm:$0xff] %v223
    %249 = vst [vmem:[#allocation2 + $0x30] sm:$0xff] %v144
    %250 = vst [vmem:[#allocation2 + $0x38] sm:$0xff] %v185
    %251 = vst [vmem:[#allocation2 + $0x40] sm:$0xff] %v226
    %252 = vst [vmem:[#allocation2 + $0x48] sm:$0xff] %v147
    %253 = vst [vmem:[#allocation2 + $0x50] sm:$0xff] %v188
    %254 = vst [vmem:[#allocation2 + $0x58] sm:$0xff] %v229
    %255 = vst [vmem:[#allocation2 + $0x60] sm:$0xff] %v150
    %256 = vst [vmem:[#allocation2 + $0x68] sm:$0xff] %v191
    %257 = vst [vmem:[#allocation2 + $0x70] sm:$0xff] %v232
    %258 = vst [vmem:[#allocation2 + $0x78] sm:$0xff] %v153
    %259 = vst [vmem:[#allocation2 + $0x80] sm:$0xff] %v194
    %260 = vst [vmem:[#allocation2 + $0x88] sm:$0xff] %v235
    %261 = vst [vmem:[#allocation2 + $0x90] sm:$0xff] %v156
    %262 = vst [vmem:[#allocation2 + $0x98] sm:$0xff] %v197
    %263 = vst [vmem:[#allocation2 + $0xa0] sm:$0xff] %v238
    %264 = vst [vmem:[#allocation2 + $0xa8] sm:$0xff] %v159
    %265 = vst [vmem:[#allocation2 + $0xb0] sm:$0xff] %v200
    %266 = vst [vmem:[#allocation2 + $0xb8] sm:$0xff] %v241
    %v267 = vld [vmem:[%s1] sm:$0xff]
    %v268 = vld [vmem:[%s5] sm:$0x1]
    %v270 = vperm.slane %v268, 0
    %s272 = smul.u32 0, 3
    %s273 = smul.addr %s272, 8
    %s274 = scalar_lea.vmem [#allocation2], %s273
    %v275 = vld [vmem:[%s274] sm:$0xff]
    %v276 = vld [vmem:[%s274 + $0x8] sm:$0xff]
    %v277 = vld [vmem:[%s274 + $0x10] sm:$0xff]
    %v278 = vld [vmem:[#allocation3] sm:$0xff]
    %v279 = vld [vmem:[#allocation3 + $0x8] sm:$0xff]
    %v280 = vld [vmem:[#allocation3 + $0x10] sm:$0xff]
    %v281 = vld [vmem:[#allocation3 + $0x18] sm:$0xff]
    %v282 = vld [vmem:[#allocation3 + $0x20] sm:$0xff]
    %v283 = vld [vmem:[#allocation3 + $0x28] sm:$0xff]
    %v284 = vld [vmem:[#allocation3 + $0x30] sm:$0xff]
    %v285 = vld [vmem:[#allocation3 + $0x38] sm:$0xff]
    %v286 = vld [vmem:[#allocation3 + $0x40] sm:$0xff]
    %v287 = vld [vmem:[#allocation3 + $0x48] sm:$0xff]
    %v288 = vld [vmem:[#allocation3 + $0x50] sm:$0xff]
    %v289 = vld [vmem:[#allocation3 + $0x58] sm:$0xff]
    %v290 = vld [vmem:[#allocation3 + $0x60] sm:$0xff]
    %v291 = vld [vmem:[#allocation3 + $0x68] sm:$0xff]
    %v292 = vld [vmem:[#allocation3 + $0x70] sm:$0xff]
    %v293 = vld [vmem:[#allocation3 + $0x78] sm:$0xff]
    %v294 = vld [vmem:[#allocation3 + $0x80] sm:$0xff]
    %v295 = vld [vmem:[#allocation3 + $0x88] sm:$0xff]
    %v296 = vld [vmem:[#allocation3 + $0x90] sm:$0xff]
    %v297 = vld [vmem:[#allocation3 + $0x98] sm:$0xff]
    %v298 = vld [vmem:[#allocation3 + $0xa0] sm:$0xff]
    %v299 = vld [vmem:[#allocation3 + $0xa8] sm:$0xff]
    %v300 = vld [vmem:[#allocation3 + $0xb0] sm:$0xff]
    %v301 = vld [vmem:[#allocation3 + $0xb8] sm:$0xff]
    %v302 = vld [vmem:[#allocation3 + $0xc0] sm:$0xff]
    %v303 = vld [vmem:[#allocation3 + $0xc8] sm:$0xff]
    %v304 = vld [vmem:[#allocation3 + $0xd0] sm:$0xff]
    %v305 = vld [vmem:[#allocation3 + $0xd8] sm:$0xff]
    %v306 = vld [vmem:[#allocation3 + $0xe0] sm:$0xff]
    %v307 = vld [vmem:[#allocation3 + $0xe8] sm:$0xff]
    %v308 = vld [vmem:[#allocation3 + $0xf0] sm:$0xff]
    %v309 = vld [vmem:[#allocation3 + $0xf8] sm:$0xff]
    %v310 = vld [vmem:[#allocation3 + $0x100] sm:$0xff]
    %v311 = vld [vmem:[#allocation3 + $0x108] sm:$0xff]
    %v312 = vld [vmem:[#allocation3 + $0x110] sm:$0xff]
    %v313 = vld [vmem:[#allocation3 + $0x118] sm:$0xff]
    %v314 = vld [vmem:[#allocation3 + $0x120] sm:$0xff]
    %v315 = vld [vmem:[#allocation3 + $0x128] sm:$0xff]
    %v316 = vld [vmem:[#allocation3 + $0x130] sm:$0xff]
    %v317 = vld [vmem:[#allocation3 + $0x138] sm:$0xff]
    %v318 = vld [vmem:[#allocation3 + $0x140] sm:$0xff]
    %v319 = vld [vmem:[#allocation3 + $0x148] sm:$0xff]
    %v320 = vld [vmem:[#allocation3 + $0x150] sm:$0xff]
    %v321 = vld [vmem:[#allocation3 + $0x158] sm:$0xff]
    %v322 = vld [vmem:[#allocation3 + $0x160] sm:$0xff]
    %v323 = vld [vmem:[#allocation3 + $0x168] sm:$0xff]
    %v324 = vld [vmem:[#allocation3 + $0x170] sm:$0xff]
    %v325 = vld [vmem:[#allocation3 + $0x178] sm:$0xff]
    %326 = vmatpush.msra.mxu0 %v323
    %327 = vmatpush.msra.mxu0 %v320
    %328 = vmatpush.msra.mxu0 %v317
    %329 = vmatpush.msra.mxu0 %v314
    %330 = vmatpush.msra.mxu0 %v311
    %331 = vmatpush.msra.mxu0 %v308
    %332 = vmatpush.msra.mxu0 %v305
    %333 = vmatpush.msra.mxu0 %v302
    %334 = vmatpush.msra.mxu0 %v299
    %335 = vmatpush.msra.mxu0 %v296
    %336 = vmatpush.msra.mxu0 %v293
    %337 = vmatpush.msra.mxu0 %v290
    %338 = vmatpush.msra.mxu0 %v287
    %339 = vmatpush.msra.mxu0 %v284
    %340 = vmatpush.msra.mxu0 %v281
    %341 = vmatpush.msra.mxu0 %v278
    %342 = vmatmul.f32.gmra.mxu0 0.0
    %v343 = vpop.f32.mrf.mxu0
    %v344 = vadd.f32 0.0, %v343
    %345 = vdwg.mxu0
    %346 = vmatpush.msra.mxu0 %v324
    %347 = vmatpush.msra.mxu0 %v321
    %348 = vmatpush.msra.mxu0 %v318
    %349 = vmatpush.msra.mxu0 %v315
    %350 = vmatpush.msra.mxu0 %v312
    %351 = vmatpush.msra.mxu0 %v309
    %352 = vmatpush.msra.mxu0 %v306
    %353 = vmatpush.msra.mxu0 %v303
    %354 = vmatpush.msra.mxu0 %v300
    %355 = vmatpush.msra.mxu0 %v297
    %356 = vmatpush.msra.mxu0 %v294
    %357 = vmatpush.msra.mxu0 %v291
    %358 = vmatpush.msra.mxu0 %v288
    %359 = vmatpush.msra.mxu0 %v285
    %360 = vmatpush.msra.mxu0 %v282
    %361 = vmatpush.msra.mxu0 %v279
    %362 = vmatmul.f32.gmra.mxu0 0.0
    %v363 = vpop.f32.mrf.mxu0
    %v364 = vadd.f32 0.0, %v363
    %365 = vdwg.mxu0
    %366 = vmatpush.msra.mxu0 %v325
    %367 = vmatpush.msra.mxu0 %v322
    %368 = vmatpush.msra.mxu0 %v319
    %369 = vmatpush.msra.mxu0 %v316
    %370 = vmatpush.msra.mxu0 %v313
    %371 = vmatpush.msra.mxu0 %v310
    %372 = vmatpush.msra.mxu0 %v307
    %373 = vmatpush.msra.mxu0 %v304
    %374 = vmatpush.msra.mxu0 %v301
    %375 = vmatpush.msra.mxu0 %v298
    %376 = vmatpush.msra.mxu0 %v295
    %377 = vmatpush.msra.mxu0 %v292
    %378 = vmatpush.msra.mxu0 %v289
    %379 = vmatpush.msra.mxu0 %v286
    %380 = vmatpush.msra.mxu0 %v283
    %381 = vmatpush.msra.mxu0 %v280
    %382 = vmatmul.f32.gmra.mxu0 0.0
    %v383 = vpop.f32.mrf.mxu0
    %v384 = vadd.f32 0.0, %v383
    %385 = vdwg.mxu0
    %v386 = vadd.f32 %v275, %v344
    %v387 = vxor.u32 %v386, 2147483648
    %v388 = vmul.f32 %v387, 1.442695
    %v389 = vpow.pop %v388
    %v390 = vadd.f32 %v389, 1.0
    %v391 = vrcp.pop %v390
    %v392 = vmul.f32 %v390, %v391
    %v393 = vsub.f32 1.0, %v392
    %v394 = vmul.f32 %v391, %v393
    %v395 = vadd.f32 %v391, %v394
    %vm396 = vweird.f32 %v390
    %vm397 = vweird.f32 %v391
    %vm398 = vmor %vm396, %vm397
    %v399 = vsel %vm398, %v391, %v395
    %v400 = vand.u32 2147483647, %v390
    %vm401 = vcmp.eq.f32.partialorder %v400, 8.507059e+37
    %v402 = vand.u32 %v390, 2147483648
    %v403 = vor.u32 1.1754944e-38, %v402
    %v404 = vsel %vm401, %v403, %v399
    %v405 = vmul.f32 1.0, %v404
    %v406 = vadd.f32 %v276, %v364
    %v407 = vxor.u32 %v406, 2147483648
    %v408 = vmul.f32 %v407, 1.442695
    %v409 = vpow.pop %v408
    %v410 = vadd.f32 %v409, 1.0
    %v411 = vrcp.pop %v410
    %v412 = vmul.f32 %v410, %v411
    %v413 = vsub.f32 1.0, %v412
    %v414 = vmul.f32 %v411, %v413
    %v415 = vadd.f32 %v411, %v414
    %vm416 = vweird.f32 %v410
    %vm417 = vweird.f32 %v411
    %vm418 = vmor %vm416, %vm417
    %v419 = vsel %vm418, %v411, %v415
    %v420 = vand.u32 2147483647, %v410
    %vm421 = vcmp.eq.f32.partialorder %v420, 8.507059e+37
    %v422 = vand.u32 %v410, 2147483648
    %v423 = vor.u32 1.1754944e-38, %v422
    %v424 = vsel %vm421, %v423, %v419
    %v425 = vmul.f32 1.0, %v424
    %v426 = vadd.f32 %v384, %v270
    %v427 = vmul.f32 %v405, %v426
    %v428 = vadd.f32 %v277, %v427
    %v429 = vtanh.pop %v428
    %v430 = vsub.f32 1.0, %v425
    %v431 = vmul.f32 %v430, %v429
    %v432 = vmul.f32 %v425, 0.0
    %v433 = vadd.f32 %v431, %v432
    %vm434 = vcmp.gt.s32.totalorder %v267, 0
    %v435 = vsel %vm434, %v433, 0.0
    %s436 = smul.u32 1, 3
    %s437 = smul.addr %s436, 8
    %s438 = scalar_lea.vmem [#allocation2], %s437
    %v439 = vld [vmem:[%s438] sm:$0xff]
    %v440 = vld [vmem:[%s438 + $0x8] sm:$0xff]
    %v441 = vld [vmem:[%s438 + $0x10] sm:$0xff]
    %442 = vmatpush.msra.mxu0 %v323
    %443 = vmatpush.msra.mxu0 %v320
    %444 = vmatpush.msra.mxu0 %v317
    %445 = vmatpush.msra.mxu0 %v314
    %446 = vmatpush.msra.mxu0 %v311
    %447 = vmatpush.msra.mxu0 %v308
    %448 = vmatpush.msra.mxu0 %v305
    %449 = vmatpush.msra.mxu0 %v302
    %450 = vmatpush.msra.mxu0 %v299
    %451 = vmatpush.msra.mxu0 %v296
    %452 = vmatpush.msra.mxu0 %v293
    %453 = vmatpush.msra.mxu0 %v290
    %454 = vmatpush.msra.mxu0 %v287
    %455 = vmatpush.msra.mxu0 %v284
    %456 = vmatpush.msra.mxu0 %v281
    %457 = vmatpush.msra.mxu0 %v278
    %458 = vmatmul.f32.gmra.mxu0 %v435
    %v459 = vpop.f32.mrf.mxu0
    %v460 = vadd.f32 0.0, %v459
    %461 = vdwg.mxu0
    %462 = vmatpush.msra.mxu0 %v324
    %463 = vmatpush.msra.mxu0 %v321
    %464 = vmatpush.msra.mxu0 %v318
    %465 = vmatpush.msra.mxu0 %v315
    %466 = vmatpush.msra.mxu0 %v312
    %467 = vmatpush.msra.mxu0 %v309
    %468 = vmatpush.msra.mxu0 %v306
    %469 = vmatpush.msra.mxu0 %v303
    %470 = vmatpush.msra.mxu0 %v300
    %471 = vmatpush.msra.mxu0 %v297
    %472 = vmatpush.msra.mxu0 %v294
    %473 = vmatpush.msra.mxu0 %v291
    %474 = vmatpush.msra.mxu0 %v288
    %475 = vmatpush.msra.mxu0 %v285
    %476 = vmatpush.msra.mxu0 %v282
    %477 = vmatpush.msra.mxu0 %v279
    %478 = vmatmul.f32.gmra.mxu0 %v435
    %v479 = vpop.f32.mrf.mxu0
    %v480 = vadd.f32 0.0, %v479
    %481 = vdwg.mxu0
    %482 = vmatpush.msra.mxu0 %v325
    %483 = vmatpush.msra.mxu0 %v322
    %484 = vmatpush.msra.mxu0 %v319
    %485 = vmatpush.msra.mxu0 %v316
    %486 = vmatpush.msra.mxu0 %v313
    %487 = vmatpush.msra.mxu0 %v310
    %488 = vmatpush.msra.mxu0 %v307
    %489 = vmatpush.msra.mxu0 %v304
    %490 = vmatpush.msra.mxu0 %v301
    %491 = vmatpush.msra.mxu0 %v298
    %492 = vmatpush.msra.mxu0 %v295
    %493 = vmatpush.msra.mxu0 %v292
    %494 = vmatpush.msra.mxu0 %v289
    %495 = vmatpush.msra.mxu0 %v286
    %496 = vmatpush.msra.mxu0 %v283
    %497 = vmatpush.msra.mxu0 %v280
    %498 = vmatmul.f32.gmra.mxu0 %v435
    %v499 = vpop.f32.mrf.mxu0
    %v500 = vadd.f32 0.0, %v499
    %501 = vdwg.mxu0
    %v502 = vadd.f32 %v439, %v460
    %v503 = vxor.u32 %v502, 2147483648
    %v504 = vmul.f32 %v503, 1.442695
    %v505 = vpow.pop %v504
    %v506 = vadd.f32 %v505, 1.0
    %v507 = vrcp.pop %v506
    %v508 = vmul.f32 %v506, %v507
    %v509 = vsub.f32 1.0, %v508
    %v510 = vmul.f32 %v507, %v509
    %v511 = vadd.f32 %v507, %v510
    %vm512 = vweird.f32 %v506
    %vm513 = vweird.f32 %v507
    %vm514 = vmor %vm512, %vm513
    %v515 = vsel %vm514, %v507, %v511
    %v516 = vand.u32 2147483647, %v506
    %vm517 = vcmp.eq.f32.partialorder %v516, 8.507059e+37
    %v518 = vand.u32 %v506, 2147483648
    %v519 = vor.u32 1.1754944e-38, %v518
    %v520 = vsel %vm517, %v519, %v515
    %v521 = vmul.f32 1.0, %v520
    %v522 = vadd.f32 %v440, %v480
    %v523 = vxor.u32 %v522, 2147483648
    %v524 = vmul.f32 %v523, 1.442695
    %v525 = vpow.pop %v524
    %v526 = vadd.f32 %v525, 1.0
    %v527 = vrcp.pop %v526
    %v528 = vmul.f32 %v526, %v527
    %v529 = vsub.f32 1.0, %v528
    %v530 = vmul.f32 %v527, %v529
    %v531 = vadd.f32 %v527, %v530
    %vm532 = vweird.f32 %v526
    %vm533 = vweird.f32 %v527
    %vm534 = vmor %vm532, %vm533
    %v535 = vsel %vm534, %v527, %v531
    %v536 = vand.u32 2147483647, %v526
    %vm537 = vcmp.eq.f32.partialorder %v536, 8.507059e+37
    %v538 = vand.u32 %v526, 2147483648
    %v539 = vor.u32 1.1754944e-38, %v538
    %v540 = vsel %vm537, %v539, %v535
    %v541 = vmul.f32 1.0, %v540
    %v542 = vadd.f32 %v500, %v270
    %v543 = vmul.f32 %v521, %v542
    %v544 = vadd.f32 %v441, %v543
    %v545 = vtanh.pop %v544
    %v546 = vsub.f32 1.0, %v541
    %v547 = vmul.f32 %v546, %v545
    %v548 = vmul.f32 %v541, %v435
    %v549 = vadd.f32 %v547, %v548
    %vm550 = vcmp.gt.s32.totalorder %v267, 1
    %v551 = vsel %vm550, %v549, %v435
    %s552 = smul.u32 2, 3
    %s553 = smul.addr %s552, 8
    %s554 = scalar_lea.vmem [#allocation2], %s553
    %v555 = vld [vmem:[%s554] sm:$0xff]
    %v556 = vld [vmem:[%s554 + $0x8] sm:$0xff]
    %v557 = vld [vmem:[%s554 + $0x10] sm:$0xff]
    %558 = vmatpush.msra.mxu0 %v323
    %559 = vmatpush.msra.mxu0 %v320
    %560 = vmatpush.msra.mxu0 %v317
    %561 = vmatpush.msra.mxu0 %v314
    %562 = vmatpush.msra.mxu0 %v311
    %563 = vmatpush.msra.mxu0 %v308
    %564 = vmatpush.msra.mxu0 %v305
    %565 = vmatpush.msra.mxu0 %v302
    %566 = vmatpush.msra.mxu0 %v299
    %567 = vmatpush.msra.mxu0 %v296
    %568 = vmatpush.msra.mxu0 %v293
    %569 = vmatpush.msra.mxu0 %v290
    %570 = vmatpush.msra.mxu0 %v287
    %571 = vmatpush.msra.mxu0 %v284
    %572 = vmatpush.msra.mxu0 %v281
    %573 = vmatpush.msra.mxu0 %v278
    %574 = vmatmul.f32.gmra.mxu0 %v551
    %v575 = vpop.f32.mrf.mxu0
    %v576 = vadd.f32 0.0, %v575
    %577 = vdwg.mxu0
    %578 = vmatpush.msra.mxu0 %v324
    %579 = vmatpush.msra.mxu0 %v321
    %580 = vmatpush.msra.mxu0 %v318
    %581 = vmatpush.msra.mxu0 %v315
    %582 = vmatpush.msra.mxu0 %v312
    %583 = vmatpush.msra.mxu0 %v309
    %584 = vmatpush.msra.mxu0 %v306
    %585 = vmatpush.msra.mxu0 %v303
    %586 = vmatpush.msra.mxu0 %v300
    %587 = vmatpush.msra.mxu0 %v297
    %588 = vmatpush.msra.mxu0 %v294
    %589 = vmatpush.msra.mxu0 %v291
    %590 = vmatpush.msra.mxu0 %v288
    %591 = vmatpush.msra.mxu0 %v285
    %592 = vmatpush.msra.mxu0 %v282
    %593 = vmatpush.msra.mxu0 %v279
    %594 = vmatmul.f32.gmra.mxu0 %v551
    %v595 = vpop.f32.mrf.mxu0
    %v596 = vadd.f32 0.0, %v595
    %597 = vdwg.mxu0
    %598 = vmatpush.msra.mxu0 %v325
    %599 = vmatpush.msra.mxu0 %v322
    %600 = vmatpush.msra.mxu0 %v319
    %601 = vmatpush.msra.mxu0 %v316
    %602 = vmatpush.msra.mxu0 %v313
    %603 = vmatpush.msra.mxu0 %v310
    %604 = vmatpush.msra.mxu0 %v307
    %605 = vmatpush.msra.mxu0 %v304
    %606 = vmatpush.msra.mxu0 %v301
    %607 = vmatpush.msra.mxu0 %v298
    %608 = vmatpush.msra.mxu0 %v295
    %609 = vmatpush.msra.mxu0 %v292
    %610 = vmatpush.msra.mxu0 %v289
    %611 = vmatpush.msra.mxu0 %v286
    %612 = vmatpush.msra.mxu0 %v283
    %613 = vmatpush.msra.mxu0 %v280
    %614 = vmatmul.f32.gmra.mxu0 %v551
    %v615 = vpop.f32.mrf.mxu0
    %v616 = vadd.f32 0.0, %v615
    %617 = vdwg.mxu0
    %v618 = vadd.f32 %v555, %v576
    %v619 = vxor.u32 %v618, 2147483648
    %v620 = vmul.f32 %v619, 1.442695
    %v621 = vpow.pop %v620
    %v622 = vadd.f32 %v621, 1.0
    %v623 = vrcp.pop %v622
    %v624 = vmul.f32 %v622, %v623
    %v625 = vsub.f32 1.0, %v624
    %v626 = vmul.f32 %v623, %v625
    %v627 = vadd.f32 %v623, %v626
    %vm628 = vweird.f32 %v622
    %vm629 = vweird.f32 %v623
    %vm630 = vmor %vm628, %vm629
    %v631 = vsel %vm630, %v623, %v627
    %v632 = vand.u32 2147483647, %v622
    %vm633 = vcmp.eq.f32.partialorder %v632, 8.507059e+37
    %v634 = vand.u32 %v622, 2147483648
    %v635 = vor.u32 1.1754944e-38, %v634
    %v636 = vsel %vm633, %v635, %v631
    %v637 = vmul.f32 1.0, %v636
    %v638 = vadd.f32 %v556, %v596
    %v639 = vxor.u32 %v638, 2147483648
    %v640 = vmul.f32 %v639, 1.442695
    %v641 = vpow.pop %v640
    %v642 = vadd.f32 %v641, 1.0
    %v643 = vrcp.pop %v642
    %v644 = vmul.f32 %v642, %v643
    %v645 = vsub.f32 1.0, %v644
    %v646 = vmul.f32 %v643, %v645
    %v647 = vadd.f32 %v643, %v646
    %vm648 = vweird.f32 %v642
    %vm649 = vweird.f32 %v643
    %vm650 = vmor %vm648, %vm649
    %v651 = vsel %vm650, %v643, %v647
    %v652 = vand.u32 2147483647, %v642
    %vm653 = vcmp.eq.f32.partialorder %v652, 8.507059e+37
    %v654 = vand.u32 %v642, 2147483648
    %v655 = vor.u32 1.1754944e-38, %v654
    %v656 = vsel %vm653, %v655, %v651
    %v657 = vmul.f32 1.0, %v656
    %v658 = vadd.f32 %v616, %v270
    %v659 = vmul.f32 %v637, %v658
    %v660 = vadd.f32 %v557, %v659
    %v661 = vtanh.pop %v660
    %v662 = vsub.f32 1.0, %v657
    %v663 = vmul.f32 %v662, %v661
    %v664 = vmul.f32 %v657, %v551
    %v665 = vadd.f32 %v663, %v664
    %vm666 = vcmp.gt.s32.totalorder %v267, 2
    %v667 = vsel %vm666, %v665, %v551
    %s668 = smul.u32 3, 3
    %s669 = smul.addr %s668, 8
    %s670 = scalar_lea.vmem [#allocation2], %s669
    %v671 = vld [vmem:[%s670] sm:$0xff]
    %v672 = vld [vmem:[%s670 + $0x8] sm:$0xff]
    %v673 = vld [vmem:[%s670 + $0x10] sm:$0xff]
    %674 = vmatpush.msra.mxu0 %v323
    %675 = vmatpush.msra.mxu0 %v320
    %676 = vmatpush.msra.mxu0 %v317
    %677 = vmatpush.msra.mxu0 %v314
    %678 = vmatpush.msra.mxu0 %v311
    %679 = vmatpush.msra.mxu0 %v308
    %680 = vmatpush.msra.mxu0 %v305
    %681 = vmatpush.msra.mxu0 %v302
    %682 = vmatpush.msra.mxu0 %v299
    %683 = vmatpush.msra.mxu0 %v296
    %684 = vmatpush.msra.mxu0 %v293
    %685 = vmatpush.msra.mxu0 %v290
    %686 = vmatpush.msra.mxu0 %v287
    %687 = vmatpush.msra.mxu0 %v284
    %688 = vmatpush.msra.mxu0 %v281
    %689 = vmatpush.msra.mxu0 %v278
    %690 = vmatmul.f32.gmra.mxu0 %v667
    %v691 = vpop.f32.mrf.mxu0
    %v692 = vadd.f32 0.0, %v691
    %693 = vdwg.mxu0
    %694 = vmatpush.msra.mxu0 %v324
    %695 = vmatpush.msra.mxu0 %v321
    %696 = vmatpush.msra.mxu0 %v318
    %697 = vmatpush.msra.mxu0 %v315
    %698 = vmatpush.msra.mxu0 %v312
    %699 = vmatpush.msra.mxu0 %v309
    %700 = vmatpush.msra.mxu0 %v306
    %701 = vmatpush.msra.mxu0 %v303
    %702 = vmatpush.msra.mxu0 %v300
    %703 = vmatpush.msra.mxu0 %v297
    %704 = vmatpush.msra.mxu0 %v294
    %705 = vmatpush.msra.mxu0 %v291
    %706 = vmatpush.msra.mxu0 %v288
    %707 = vmatpush.msra.mxu0 %v285
    %708 = vmatpush.msra.mxu0 %v282
    %709 = vmatpush.msra.mxu0 %v279
    %710 = vmatmul.f32.gmra.mxu0 %v667
    %v711 = vpop.f32.mrf.mxu0
    %v712 = vadd.f32 0.0, %v711
    %713 = vdwg.mxu0
    %714 = vmatpush.msra.mxu0 %v325
    %715 = vmatpush.msra.mxu0 %v322
    %716 = vmatpush.msra.mxu0 %v319
    %717 = vmatpush.msra.mxu0 %v316
    %718 = vmatpush.msra.mxu0 %v313
    %719 = vmatpush.msra.mxu0 %v310
    %720 = vmatpush.msra.mxu0 %v307
    %721 = vmatpush.msra.mxu0 %v304
    %722 = vmatpush.msra.mxu0 %v301
    %723 = vmatpush.msra.mxu0 %v298
    %724 = vmatpush.msra.mxu0 %v295
    %725 = vmatpush.msra.mxu0 %v292
    %726 = vmatpush.msra.mxu0 %v289
    %727 = vmatpush.msra.mxu0 %v286
    %728 = vmatpush.msra.mxu0 %v283
    %729 = vmatpush.msra.mxu0 %v280
    %730 = vmatmul.f32.gmra.mxu0 %v667
    %v731 = vpop.f32.mrf.mxu0
    %v732 = vadd.f32 0.0, %v731
    %733 = vdwg.mxu0
    %v734 = vadd.f32 %v671, %v692
    %v735 = vxor.u32 %v734, 2147483648
    %v736 = vmul.f32 %v735, 1.442695
    %v737 = vpow.pop %v736
    %v738 = vadd.f32 %v737, 1.0
    %v739 = vrcp.pop %v738
    %v740 = vmul.f32 %v738, %v739
    %v741 = vsub.f32 1.0, %v740
    %v742 = vmul.f32 %v739, %v741
    %v743 = vadd.f32 %v739, %v742
    %vm744 = vweird.f32 %v738
    %vm745 = vweird.f32 %v739
    %vm746 = vmor %vm744, %vm745
    %v747 = vsel %vm746, %v739, %v743
    %v748 = vand.u32 2147483647, %v738
    %vm749 = vcmp.eq.f32.partialorder %v748, 8.507059e+37
    %v750 = vand.u32 %v738, 2147483648
    %v751 = vor.u32 1.1754944e-38, %v750
    %v752 = vsel %vm749, %v751, %v747
    %v753 = vmul.f32 1.0, %v752
    %v754 = vadd.f32 %v672, %v712
    %v755 = vxor.u32 %v754, 2147483648
    %v756 = vmul.f32 %v755, 1.442695
    %v757 = vpow.pop %v756
    %v758 = vadd.f32 %v757, 1.0
    %v759 = vrcp.pop %v758
    %v760 = vmul.f32 %v758, %v759
    %v761 = vsub.f32 1.0, %v760
    %v762 = vmul.f32 %v759, %v761
    %v763 = vadd.f32 %v759, %v762
    %vm764 = vweird.f32 %v758
    %vm765 = vweird.f32 %v759
    %vm766 = vmor %vm764, %vm765
    %v767 = vsel %vm766, %v759, %v763
    %v768 = vand.u32 2147483647, %v758
    %vm769 = vcmp.eq.f32.partialorder %v768, 8.507059e+37
    %v770 = vand.u32 %v758, 2147483648
    %v771 = vor.u32 1.1754944e-38, %v770
    %v772 = vsel %vm769, %v771, %v767
    %v773 = vmul.f32 1.0, %v772
    %v774 = vadd.f32 %v732, %v270
    %v775 = vmul.f32 %v753, %v774
    %v776 = vadd.f32 %v673, %v775
    %v777 = vtanh.pop %v776
    %v778 = vsub.f32 1.0, %v773
    %v779 = vmul.f32 %v778, %v777
    %v780 = vmul.f32 %v773, %v667
    %v781 = vadd.f32 %v779, %v780
    %vm782 = vcmp.gt.s32.totalorder %v267, 3
    %v783 = vsel %vm782, %v781, %v667
    %s784 = smul.u32 4, 3
    %s785 = smul.addr %s784, 8
    %s786 = scalar_lea.vmem [#allocation2], %s785
    %v787 = vld [vmem:[%s786] sm:$0xff]
    %v788 = vld [vmem:[%s786 + $0x8] sm:$0xff]
    %v789 = vld [vmem:[%s786 + $0x10] sm:$0xff]
    %790 = vmatpush.msra.mxu0 %v323
    %791 = vmatpush.msra.mxu0 %v320
    %792 = vmatpush.msra.mxu0 %v317
    %793 = vmatpush.msra.mxu0 %v314
    %794 = vmatpush.msra.mxu0 %v311
    %795 = vmatpush.msra.mxu0 %v308
    %796 = vmatpush.msra.mxu0 %v305
    %797 = vmatpush.msra.mxu0 %v302
    %798 = vmatpush.msra.mxu0 %v299
    %799 = vmatpush.msra.mxu0 %v296
    %800 = vmatpush.msra.mxu0 %v293
    %801 = vmatpush.msra.mxu0 %v290
    %802 = vmatpush.msra.mxu0 %v287
    %803 = vmatpush.msra.mxu0 %v284
    %804 = vmatpush.msra.mxu0 %v281
    %805 = vmatpush.msra.mxu0 %v278
    %806 = vmatmul.f32.gmra.mxu0 %v783
    %v807 = vpop.f32.mrf.mxu0
    %v808 = vadd.f32 0.0, %v807
    %809 = vdwg.mxu0
    %810 = vmatpush.msra.mxu0 %v324
    %811 = vmatpush.msra.mxu0 %v321
    %812 = vmatpush.msra.mxu0 %v318
    %813 = vmatpush.msra.mxu0 %v315
    %814 = vmatpush.msra.mxu0 %v312
    %815 = vmatpush.msra.mxu0 %v309
    %816 = vmatpush.msra.mxu0 %v306
    %817 = vmatpush.msra.mxu0 %v303
    %818 = vmatpush.msra.mxu0 %v300
    %819 = vmatpush.msra.mxu0 %v297
    %820 = vmatpush.msra.mxu0 %v294
    %821 = vmatpush.msra.mxu0 %v291
    %822 = vmatpush.msra.mxu0 %v288
    %823 = vmatpush.msra.mxu0 %v285
    %824 = vmatpush.msra.mxu0 %v282
    %825 = vmatpush.msra.mxu0 %v279
    %826 = vmatmul.f32.gmra.mxu0 %v783
    %v827 = vpop.f32.mrf.mxu0
    %v828 = vadd.f32 0.0, %v827
    %829 = vdwg.mxu0
    %830 = vmatpush.msra.mxu0 %v325
    %831 = vmatpush.msra.mxu0 %v322
    %832 = vmatpush.msra.mxu0 %v319
    %833 = vmatpush.msra.mxu0 %v316
    %834 = vmatpush.msra.mxu0 %v313
    %835 = vmatpush.msra.mxu0 %v310
    %836 = vmatpush.msra.mxu0 %v307
    %837 = vmatpush.msra.mxu0 %v304
    %838 = vmatpush.msra.mxu0 %v301
    %839 = vmatpush.msra.mxu0 %v298
    %840 = vmatpush.msra.mxu0 %v295
    %841 = vmatpush.msra.mxu0 %v292
    %842 = vmatpush.msra.mxu0 %v289
    %843 = vmatpush.msra.mxu0 %v286
    %844 = vmatpush.msra.mxu0 %v283
    %845 = vmatpush.msra.mxu0 %v280
    %846 = vmatmul.f32.gmra.mxu0 %v783
    %v847 = vpop.f32.mrf.mxu0
    %v848 = vadd.f32 0.0, %v847
    %849 = vdwg.mxu0
    %v850 = vadd.f32 %v787, %v808
    %v851 = vxor.u32 %v850, 2147483648
    %v852 = vmul.f32 %v851, 1.442695
    %v853 = vpow.pop %v852
    %v854 = vadd.f32 %v853, 1.0
    %v855 = vrcp.pop %v854
    %v856 = vmul.f32 %v854, %v855
    %v857 = vsub.f32 1.0, %v856
    %v858 = vmul.f32 %v855, %v857
    %v859 = vadd.f32 %v855, %v858
    %vm860 = vweird.f32 %v854
    %vm861 = vweird.f32 %v855
    %vm862 = vmor %vm860, %vm861
    %v863 = vsel %vm862, %v855, %v859
    %v864 = vand.u32 2147483647, %v854
    %vm865 = vcmp.eq.f32.partialorder %v864, 8.507059e+37
    %v866 = vand.u32 %v854, 2147483648
    %v867 = vor.u32 1.1754944e-38, %v866
    %v868 = vsel %vm865, %v867, %v863
    %v869 = vmul.f32 1.0, %v868
    %v870 = vadd.f32 %v788, %v828
    %v871 = vxor.u32 %v870, 2147483648
    %v872 = vmul.f32 %v871, 1.442695
    %v873 = vpow.pop %v872
    %v874 = vadd.f32 %v873, 1.0
    %v875 = vrcp.pop %v874
    %v876 = vmul.f32 %v874, %v875
    %v877 = vsub.f32 1.0, %v876
    %v878 = vmul.f32 %v875, %v877
    %v879 = vadd.f32 %v875, %v878
    %vm880 = vweird.f32 %v874
    %vm881 = vweird.f32 %v875
    %vm882 = vmor %vm880, %vm881
    %v883 = vsel %vm882, %v875, %v879
    %v884 = vand.u32 2147483647, %v874
    %vm885 = vcmp.eq.f32.partialorder %v884, 8.507059e+37
    %v886 = vand.u32 %v874, 2147483648
    %v887 = vor.u32 1.1754944e-38, %v886
    %v888 = vsel %vm885, %v887, %v883
    %v889 = vmul.f32 1.0, %v888
    %v890 = vadd.f32 %v848, %v270
    %v891 = vmul.f32 %v869, %v890
    %v892 = vadd.f32 %v789, %v891
    %v893 = vtanh.pop %v892
    %v894 = vsub.f32 1.0, %v889
    %v895 = vmul.f32 %v894, %v893
    %v896 = vmul.f32 %v889, %v783
    %v897 = vadd.f32 %v895, %v896
    %vm898 = vcmp.gt.s32.totalorder %v267, 4
    %v899 = vsel %vm898, %v897, %v783
    %s900 = smul.u32 5, 3
    %s901 = smul.addr %s900, 8
    %s902 = scalar_lea.vmem [#allocation2], %s901
    %v903 = vld [vmem:[%s902] sm:$0xff]
    %v904 = vld [vmem:[%s902 + $0x8] sm:$0xff]
    %v905 = vld [vmem:[%s902 + $0x10] sm:$0xff]
    %906 = vmatpush.msra.mxu0 %v323
    %907 = vmatpush.msra.mxu0 %v320
    %908 = vmatpush.msra.mxu0 %v317
    %909 = vmatpush.msra.mxu0 %v314
    %910 = vmatpush.msra.mxu0 %v311
    %911 = vmatpush.msra.mxu0 %v308
    %912 = vmatpush.msra.mxu0 %v305
    %913 = vmatpush.msra.mxu0 %v302
    %914 = vmatpush.msra.mxu0 %v299
    %915 = vmatpush.msra.mxu0 %v296
    %916 = vmatpush.msra.mxu0 %v293
    %917 = vmatpush.msra.mxu0 %v290
    %918 = vmatpush.msra.mxu0 %v287
    %919 = vmatpush.msra.mxu0 %v284
    %920 = vmatpush.msra.mxu0 %v281
    %921 = vmatpush.msra.mxu0 %v278
    %922 = vmatmul.f32.gmra.mxu0 %v899
    %v923 = vpop.f32.mrf.mxu0
    %v924 = vadd.f32 0.0, %v923
    %925 = vdwg.mxu0
    %926 = vmatpush.msra.mxu0 %v324
    %927 = vmatpush.msra.mxu0 %v321
    %928 = vmatpush.msra.mxu0 %v318
    %929 = vmatpush.msra.mxu0 %v315
    %930 = vmatpush.msra.mxu0 %v312
    %931 = vmatpush.msra.mxu0 %v309
    %932 = vmatpush.msra.mxu0 %v306
    %933 = vmatpush.msra.mxu0 %v303
    %934 = vmatpush.msra.mxu0 %v300
    %935 = vmatpush.msra.mxu0 %v297
    %936 = vmatpush.msra.mxu0 %v294
    %937 = vmatpush.msra.mxu0 %v291
    %938 = vmatpush.msra.mxu0 %v288
    %939 = vmatpush.msra.mxu0 %v285
    %940 = vmatpush.msra.mxu0 %v282
    %941 = vmatpush.msra.mxu0 %v279
    %942 = vmatmul.f32.gmra.mxu0 %v899
    %v943 = vpop.f32.mrf.mxu0
    %v944 = vadd.f32 0.0, %v943
    %945 = vdwg.mxu0
    %946 = vmatpush.msra.mxu0 %v325
    %947 = vmatpush.msra.mxu0 %v322
    %948 = vmatpush.msra.mxu0 %v319
    %949 = vmatpush.msra.mxu0 %v316
    %950 = vmatpush.msra.mxu0 %v313
    %951 = vmatpush.msra.mxu0 %v310
    %952 = vmatpush.msra.mxu0 %v307
    %953 = vmatpush.msra.mxu0 %v304
    %954 = vmatpush.msra.mxu0 %v301
    %955 = vmatpush.msra.mxu0 %v298
    %956 = vmatpush.msra.mxu0 %v295
    %957 = vmatpush.msra.mxu0 %v292
    %958 = vmatpush.msra.mxu0 %v289
    %959 = vmatpush.msra.mxu0 %v286
    %960 = vmatpush.msra.mxu0 %v283
    %961 = vmatpush.msra.mxu0 %v280
    %962 = vmatmul.f32.gmra.mxu0 %v899
    %v963 = vpop.f32.mrf.mxu0
    %v964 = vadd.f32 0.0, %v963
    %965 = vdwg.mxu0
    %v966 = vadd.f32 %v903, %v924
    %v967 = vxor.u32 %v966, 2147483648
    %v968 = vmul.f32 %v967, 1.442695
    %v969 = vpow.pop %v968
    %v970 = vadd.f32 %v969, 1.0
    %v971 = vrcp.pop %v970
    %v972 = vmul.f32 %v970, %v971
    %v973 = vsub.f32 1.0, %v972
    %v974 = vmul.f32 %v971, %v973
    %v975 = vadd.f32 %v971, %v974
    %vm976 = vweird.f32 %v970
    %vm977 = vweird.f32 %v971
    %vm978 = vmor %vm976, %vm977
    %v979 = vsel %vm978, %v971, %v975
    %v980 = vand.u32 2147483647, %v970
    %vm981 = vcmp.eq.f32.partialorder %v980, 8.507059e+37
    %v982 = vand.u32 %v970, 2147483648
    %v983 = vor.u32 1.1754944e-38, %v982
    %v984 = vsel %vm981, %v983, %v979
    %v985 = vmul.f32 1.0, %v984
    %v986 = vadd.f32 %v904, %v944
    %v987 = vxor.u32 %v986, 2147483648
    %v988 = vmul.f32 %v987, 1.442695
    %v989 = vpow.pop %v988
    %v990 = vadd.f32 %v989, 1.0
    %v991 = vrcp.pop %v990
    %v992 = vmul.f32 %v990, %v991
    %v993 = vsub.f32 1.0, %v992
    %v994 = vmul.f32 %v991, %v993
    %v995 = vadd.f32 %v991, %v994
    %vm996 = vweird.f32 %v990
    %vm997 = vweird.f32 %v991
    %vm998 = vmor %vm996, %vm997
    %v999 = vsel %vm998, %v991, %v995
    %v1000 = vand.u32 2147483647, %v990
    %vm1001 = vcmp.eq.f32.partialorder %v1000, 8.507059e+37
    %v1002 = vand.u32 %v990, 2147483648
    %v1003 = vor.u32 1.1754944e-38, %v1002
    %v1004 = vsel %vm1001, %v1003, %v999
    %v1005 = vmul.f32 1.0, %v1004
    %v1006 = vadd.f32 %v964, %v270
    %v1007 = vmul.f32 %v985, %v1006
    %v1008 = vadd.f32 %v905, %v1007
    %v1009 = vtanh.pop %v1008
    %v1010 = vsub.f32 1.0, %v1005
    %v1011 = vmul.f32 %v1010, %v1009
    %v1012 = vmul.f32 %v1005, %v899
    %v1013 = vadd.f32 %v1011, %v1012
    %vm1014 = vcmp.gt.s32.totalorder %v267, 5
    %v1015 = vsel %vm1014, %v1013, %v899
    %s1016 = smul.u32 6, 3
    %s1017 = smul.addr %s1016, 8
    %s1018 = scalar_lea.vmem [#allocation2], %s1017
    %v1019 = vld [vmem:[%s1018] sm:$0xff]
    %v1020 = vld [vmem:[%s1018 + $0x8] sm:$0xff]
    %v1021 = vld [vmem:[%s1018 + $0x10] sm:$0xff]
    %1022 = vmatpush.msra.mxu0 %v323
    %1023 = vmatpush.msra.mxu0 %v320
    %1024 = vmatpush.msra.mxu0 %v317
    %1025 = vmatpush.msra.mxu0 %v314
    %1026 = vmatpush.msra.mxu0 %v311
    %1027 = vmatpush.msra.mxu0 %v308
    %1028 = vmatpush.msra.mxu0 %v305
    %1029 = vmatpush.msra.mxu0 %v302
    %1030 = vmatpush.msra.mxu0 %v299
    %1031 = vmatpush.msra.mxu0 %v296
    %1032 = vmatpush.msra.mxu0 %v293
    %1033 = vmatpush.msra.mxu0 %v290
    %1034 = vmatpush.msra.mxu0 %v287
    %1035 = vmatpush.msra.mxu0 %v284
    %1036 = vmatpush.msra.mxu0 %v281
    %1037 = vmatpush.msra.mxu0 %v278
    %1038 = vmatmul.f32.gmra.mxu0 %v1015
    %v1039 = vpop.f32.mrf.mxu0
    %v1040 = vadd.f32 0.0, %v1039
    %1041 = vdwg.mxu0
    %1042 = vmatpush.msra.mxu0 %v324
    %1043 = vmatpush.msra.mxu0 %v321
    %1044 = vmatpush.msra.mxu0 %v318
    %1045 = vmatpush.msra.mxu0 %v315
    %1046 = vmatpush.msra.mxu0 %v312
    %1047 = vmatpush.msra.mxu0 %v309
    %1048 = vmatpush.msra.mxu0 %v306
    %1049 = vmatpush.msra.mxu0 %v303
    %1050 = vmatpush.msra.mxu0 %v300
    %1051 = vmatpush.msra.mxu0 %v297
    %1052 = vmatpush.msra.mxu0 %v294
    %1053 = vmatpush.msra.mxu0 %v291
    %1054 = vmatpush.msra.mxu0 %v288
    %1055 = vmatpush.msra.mxu0 %v285
    %1056 = vmatpush.msra.mxu0 %v282
    %1057 = vmatpush.msra.mxu0 %v279
    %1058 = vmatmul.f32.gmra.mxu0 %v1015
    %v1059 = vpop.f32.mrf.mxu0
    %v1060 = vadd.f32 0.0, %v1059
    %1061 = vdwg.mxu0
    %1062 = vmatpush.msra.mxu0 %v325
    %1063 = vmatpush.msra.mxu0 %v322
    %1064 = vmatpush.msra.mxu0 %v319
    %1065 = vmatpush.msra.mxu0 %v316
    %1066 = vmatpush.msra.mxu0 %v313
    %1067 = vmatpush.msra.mxu0 %v310
    %1068 = vmatpush.msra.mxu0 %v307
    %1069 = vmatpush.msra.mxu0 %v304
    %1070 = vmatpush.msra.mxu0 %v301
    %1071 = vmatpush.msra.mxu0 %v298
    %1072 = vmatpush.msra.mxu0 %v295
    %1073 = vmatpush.msra.mxu0 %v292
    %1074 = vmatpush.msra.mxu0 %v289
    %1075 = vmatpush.msra.mxu0 %v286
    %1076 = vmatpush.msra.mxu0 %v283
    %1077 = vmatpush.msra.mxu0 %v280
    %1078 = vmatmul.f32.gmra.mxu0 %v1015
    %v1079 = vpop.f32.mrf.mxu0
    %v1080 = vadd.f32 0.0, %v1079
    %1081 = vdwg.mxu0
    %v1082 = vadd.f32 %v1019, %v1040
    %v1083 = vxor.u32 %v1082, 2147483648
    %v1084 = vmul.f32 %v1083, 1.442695
    %v1085 = vpow.pop %v1084
    %v1086 = vadd.f32 %v1085, 1.0
    %v1087 = vrcp.pop %v1086
    %v1088 = vmul.f32 %v1086, %v1087
    %v1089 = vsub.f32 1.0, %v1088
    %v1090 = vmul.f32 %v1087, %v1089
    %v1091 = vadd.f32 %v1087, %v1090
    %vm1092 = vweird.f32 %v1086
    %vm1093 = vweird.f32 %v1087
    %vm1094 = vmor %vm1092, %vm1093
    %v1095 = vsel %vm1094, %v1087, %v1091
    %v1096 = vand.u32 2147483647, %v1086
    %vm1097 = vcmp.eq.f32.partialorder %v1096, 8.507059e+37
    %v1098 = vand.u32 %v1086, 2147483648
    %v1099 = vor.u32 1.1754944e-38, %v1098
    %v1100 = vsel %vm1097, %v1099, %v1095
    %v1101 = vmul.f32 1.0, %v1100
    %v1102 = vadd.f32 %v1020, %v1060
    %v1103 = vxor.u32 %v1102, 2147483648
    %v1104 = vmul.f32 %v1103, 1.442695
    %v1105 = vpow.pop %v1104
    %v1106 = vadd.f32 %v1105, 1.0
    %v1107 = vrcp.pop %v1106
    %v1108 = vmul.f32 %v1106, %v1107
    %v1109 = vsub.f32 1.0, %v1108
    %v1110 = vmul.f32 %v1107, %v1109
    %v1111 = vadd.f32 %v1107, %v1110
    %vm1112 = vweird.f32 %v1106
    %vm1113 = vweird.f32 %v1107
    %vm1114 = vmor %vm1112, %vm1113
    %v1115 = vsel %vm1114, %v1107, %v1111
    %v1116 = vand.u32 2147483647, %v1106
    %vm1117 = vcmp.eq.f32.partialorder %v1116, 8.507059e+37
    %v1118 = vand.u32 %v1106, 2147483648
    %v1119 = vor.u32 1.1754944e-38, %v1118
    %v1120 = vsel %vm1117, %v1119, %v1115
    %v1121 = vmul.f32 1.0, %v1120
    %v1122 = vadd.f32 %v1080, %v270
    %v1123 = vmul.f32 %v1101, %v1122
    %v1124 = vadd.f32 %v1021, %v1123
    %v1125 = vtanh.pop %v1124
    %v1126 = vsub.f32 1.0, %v1121
    %v1127 = vmul.f32 %v1126, %v1125
    %v1128 = vmul.f32 %v1121, %v1015
    %v1129 = vadd.f32 %v1127, %v1128
    %vm1130 = vcmp.gt.s32.totalorder %v267, 6
    %v1131 = vsel %vm1130, %v1129, %v1015
    %s1132 = smul.u32 7, 3
    %s1133 = smul.addr %s1132, 8
    %s1134 = scalar_lea.vmem [#allocation2], %s1133
    %v1135 = vld [vmem:[%s1134] sm:$0xff]
    %v1136 = vld [vmem:[%s1134 + $0x8] sm:$0xff]
    %v1137 = vld [vmem:[%s1134 + $0x10] sm:$0xff]
    %1138 = vmatpush.msra.mxu0 %v323
    %1139 = vmatpush.msra.mxu0 %v320
    %1140 = vmatpush.msra.mxu0 %v317
    %1141 = vmatpush.msra.mxu0 %v314
    %1142 = vmatpush.msra.mxu0 %v311
    %1143 = vmatpush.msra.mxu0 %v308
    %1144 = vmatpush.msra.mxu0 %v305
    %1145 = vmatpush.msra.mxu0 %v302
    %1146 = vmatpush.msra.mxu0 %v299
    %1147 = vmatpush.msra.mxu0 %v296
    %1148 = vmatpush.msra.mxu0 %v293
    %1149 = vmatpush.msra.mxu0 %v290
    %1150 = vmatpush.msra.mxu0 %v287
    %1151 = vmatpush.msra.mxu0 %v284
    %1152 = vmatpush.msra.mxu0 %v281
    %1153 = vmatpush.msra.mxu0 %v278
    %1154 = vmatmul.f32.gmra.mxu0 %v1131
    %v1155 = vpop.f32.mrf.mxu0
    %v1156 = vadd.f32 0.0, %v1155
    %1157 = vdwg.mxu0
    %1158 = vmatpush.msra.mxu0 %v324
    %1159 = vmatpush.msra.mxu0 %v321
    %1160 = vmatpush.msra.mxu0 %v318
    %1161 = vmatpush.msra.mxu0 %v315
    %1162 = vmatpush.msra.mxu0 %v312
    %1163 = vmatpush.msra.mxu0 %v309
    %1164 = vmatpush.msra.mxu0 %v306
    %1165 = vmatpush.msra.mxu0 %v303
    %1166 = vmatpush.msra.mxu0 %v300
    %1167 = vmatpush.msra.mxu0 %v297
    %1168 = vmatpush.msra.mxu0 %v294
    %1169 = vmatpush.msra.mxu0 %v291
    %1170 = vmatpush.msra.mxu0 %v288
    %1171 = vmatpush.msra.mxu0 %v285
    %1172 = vmatpush.msra.mxu0 %v282
    %1173 = vmatpush.msra.mxu0 %v279
    %1174 = vmatmul.f32.gmra.mxu0 %v1131
    %v1175 = vpop.f32.mrf.mxu0
    %v1176 = vadd.f32 0.0, %v1175
    %1177 = vdwg.mxu0
    %1178 = vmatpush.msra.mxu0 %v325
    %1179 = vmatpush.msra.mxu0 %v322
    %1180 = vmatpush.msra.mxu0 %v319
    %1181 = vmatpush.msra.mxu0 %v316
    %1182 = vmatpush.msra.mxu0 %v313
    %1183 = vmatpush.msra.mxu0 %v310
    %1184 = vmatpush.msra.mxu0 %v307
    %1185 = vmatpush.msra.mxu0 %v304
    %1186 = vmatpush.msra.mxu0 %v301
    %1187 = vmatpush.msra.mxu0 %v298
    %1188 = vmatpush.msra.mxu0 %v295
    %1189 = vmatpush.msra.mxu0 %v292
    %1190 = vmatpush.msra.mxu0 %v289
    %1191 = vmatpush.msra.mxu0 %v286
    %1192 = vmatpush.msra.mxu0 %v283
    %1193 = vmatpush.msra.mxu0 %v280
    %1194 = vmatmul.f32.gmra.mxu0 %v1131
    %v1195 = vpop.f32.mrf.mxu0
    %v1196 = vadd.f32 0.0, %v1195
    %1197 = vdwg.mxu0
    %v1198 = vadd.f32 %v1135, %v1156
    %v1199 = vxor.u32 %v1198, 2147483648
    %v1200 = vmul.f32 %v1199, 1.442695
    %v1201 = vpow.pop %v1200
    %v1202 = vadd.f32 %v1201, 1.0
    %v1203 = vrcp.pop %v1202
    %v1204 = vmul.f32 %v1202, %v1203
    %v1205 = vsub.f32 1.0, %v1204
    %v1206 = vmul.f32 %v1203, %v1205
    %v1207 = vadd.f32 %v1203, %v1206
    %vm1208 = vweird.f32 %v1202
    %vm1209 = vweird.f32 %v1203
    %vm1210 = vmor %vm1208, %vm1209
    %v1211 = vsel %vm1210, %v1203, %v1207
    %v1212 = vand.u32 2147483647, %v1202
    %vm1213 = vcmp.eq.f32.partialorder %v1212, 8.507059e+37
    %v1214 = vand.u32 %v1202, 2147483648
    %v1215 = vor.u32 1.1754944e-38, %v1214
    %v1216 = vsel %vm1213, %v1215, %v1211
    %v1217 = vmul.f32 1.0, %v1216
    %v1218 = vadd.f32 %v1136, %v1176
    %v1219 = vxor.u32 %v1218, 2147483648
    %v1220 = vmul.f32 %v1219, 1.442695
    %v1221 = vpow.pop %v1220
    %v1222 = vadd.f32 %v1221, 1.0
    %v1223 = vrcp.pop %v1222
    %v1224 = vmul.f32 %v1222, %v1223
    %v1225 = vsub.f32 1.0, %v1224
    %v1226 = vmul.f32 %v1223, %v1225
    %v1227 = vadd.f32 %v1223, %v1226
    %vm1228 = vweird.f32 %v1222
    %vm1229 = vweird.f32 %v1223
    %vm1230 = vmor %vm1228, %vm1229
    %v1231 = vsel %vm1230, %v1223, %v1227
    %v1232 = vand.u32 2147483647, %v1222
    %vm1233 = vcmp.eq.f32.partialorder %v1232, 8.507059e+37
    %v1234 = vand.u32 %v1222, 2147483648
    %v1235 = vor.u32 1.1754944e-38, %v1234
    %v1236 = vsel %vm1233, %v1235, %v1231
    %v1237 = vmul.f32 1.0, %v1236
    %v1238 = vadd.f32 %v1196, %v270
    %v1239 = vmul.f32 %v1217, %v1238
    %v1240 = vadd.f32 %v1137, %v1239
    %v1241 = vtanh.pop %v1240
    %v1242 = vsub.f32 1.0, %v1237
    %v1243 = vmul.f32 %v1242, %v1241
    %v1244 = vmul.f32 %v1237, %v1131
    %v1245 = vadd.f32 %v1243, %v1244
    %vm1246 = vcmp.gt.s32.totalorder %v267, 7
    %v1247 = vsel %vm1246, %v1245, %v1131
    %v1248 = vld [vmem:[#allocation6] sm:$0xff]
    %v1249 = vld [vmem:[#allocation6 + $0x8] sm:$0xff]
    %v1250 = vld [vmem:[#allocation6 + $0x10] sm:$0xff]
    %v1251 = vld [vmem:[#allocation6 + $0x18] sm:$0xff]
    %v1252 = vld [vmem:[#allocation6 + $0x20] sm:$0xff]
    %v1253 = vld [vmem:[#allocation6 + $0x28] sm:$0xff]
    %v1254 = vld [vmem:[#allocation6 + $0x30] sm:$0xff]
    %v1255 = vld [vmem:[#allocation6 + $0x38] sm:$0xff]
    %v1256 = vld [vmem:[#allocation6 + $0x40] sm:$0xff]
    %v1257 = vld [vmem:[#allocation6 + $0x48] sm:$0xff]
    %v1258 = vld [vmem:[#allocation6 + $0x50] sm:$0xff]
    %v1259 = vld [vmem:[#allocation6 + $0x58] sm:$0xff]
    %v1260 = vld [vmem:[#allocation6 + $0x60] sm:$0xff]
    %v1261 = vld [vmem:[#allocation6 + $0x68] sm:$0xff]
    %v1262 = vld [vmem:[#allocation6 + $0x70] sm:$0xff]
    %v1263 = vld [vmem:[#allocation6 + $0x78] sm:$0xff]
    %v1264 = vld [vmem:[%s7] sm:$0x1]
    %v1266 = vperm.slane %v1264, 0
    %1268 = vmatpush.msra.mxu0 %v1263
    %1269 = vmatpush.msra.mxu0 %v1262
    %1270 = vmatpush.msra.mxu0 %v1261
    %1271 = vmatpush.msra.mxu0 %v1260
    %1272 = vmatpush.msra.mxu0 %v1259
    %1273 = vmatpush.msra.mxu0 %v1258
    %1274 = vmatpush.msra.mxu0 %v1257
    %1275 = vmatpush.msra.mxu0 %v1256
    %1276 = vmatpush.msra.mxu0 %v1255
    %1277 = vmatpush.msra.mxu0 %v1254
    %1278 = vmatpush.msra.mxu0 %v1253
    %1279 = vmatpush.msra.mxu0 %v1252
    %1280 = vmatpush.msra.mxu0 %v1251
    %1281 = vmatpush.msra.mxu0 %v1250
    %1282 = vmatpush.msra.mxu0 %v1249
    %1283 = vmatpush.msra.mxu0 %v1248
    %1284 = vmatmul.f32.gmra.mxu0 %v1247
    %v1285 = vpop.f32.mrf.mxu0
    %v1286 = vadd.f32 %v1266, %v1285
    %1287 = vdwg.mxu0
    %1288 = vst [vmem:[#allocation8] sm:$0xff] %v1286
    // Predicated region
    $region42: #{tpu_custom_call.1} parent=1 // pred_check
      _
    $region43: #{tpu_custom_call.1} parent=1 // pred_check_branch
      %1290 = sbr.rel (0) target = $region45
    $region44: #{tpu_custom_call.1} parent=1 // pred_region
      %1292 = vsyncadd [#allocation5], 0
      %s1294 = sshll.u32 [#allocation8], 4
      %s1295 = int_to_ptr.vmem [resolvable:$true] %s1294
      %s1296 = sshll.u32 %s8, 4
      %s1297 = int_to_ptr.hbm [resolvable:$true] %s1296
      %1299 = dma.vmem_to_hbm [thread:$0]  %s1295, 128, %s1297, [#allocation5]
    $region45: #{tpu_custom_call.1} parent=1 // pred_fallthru
      _
    // Predicated region
    $region46: #{tpu_custom_call.1} parent=1 // pred_check
      _
    $region47: #{tpu_custom_call.1} parent=1 // pred_check_branch
      %1301 = sbr.rel (0) target = $region49
    $region48: #{tpu_custom_call.1} parent=1 // pred_region
      %1303 = dma.done [#allocation5], 128
    $region49: #{tpu_custom_call.1} parent=1 // pred_fallthru
      _
    %1304 = vsyncpa [#allocation4], 1
    %1305 = vsyncpa [#allocation7], 1
    %1306 = vsyncpa [#allocation5], 1

</llo_original>
